<compile_context>
chip_gen: v6e
topology: v6e:2x2x1
jax: 0.10.0
libtpu: 0.0.40
codegen_flags: <defaults>
</compile_context>

<pallas_src>
import jax
import jax.numpy as jnp
from jax.experimental import pallas as pl
from jax.experimental.pallas import tpu as pltpu

D_FEAT = 512            # CLIP feature dim (image and text)
D_H1 = 512
D_H2 = 256
D_OUT_PAD = 128         # Linear(256, 1) padded to 128 lanes; column 0 = logit


def _round_up(x, m):
    return ((x + m - 1) // m) * m


# -------------------- Pallas kernel: the classifier MLP hot path -----------
def _classifier_kernel(img_ref, txt_ref, w1a_ref, w1b_ref, b1_ref,
                       w2_ref, b2_ref, w3_ref, b3_ref, o_ref):
    img = img_ref[...]                                                  # (TB, 512) bf16
    txt = txt_ref[...]                                                  # (TB, 512) bf16
    # Layer 1: concat fused as split-weight matmul, f32 accumulation on MXU.
    h1 = (jnp.dot(img, w1a_ref[...], preferred_element_type=jnp.float32)
          + jnp.dot(txt, w1b_ref[...], preferred_element_type=jnp.float32)
          + b1_ref[...])
    h1 = jnp.maximum(h1, 0.0)                                           # ReLU
    # nn.Dropout(0.2) is identity at inference time.
    h2 = jnp.dot(h1.astype(jnp.bfloat16), w2_ref[...],
                 preferred_element_type=jnp.float32) + b2_ref[...]
    h2 = jnp.maximum(h2, 0.0)                                           # ReLU
    o_ref[...] = (jnp.dot(h2.astype(jnp.bfloat16), w3_ref[...],
                          preferred_element_type=jnp.float32) + b3_ref[...])


def classifier_forward(image_features, text_features, params):
    """(B,512)+(B,512) f32 features -> similarity logits (B, 1) f32."""
    B = image_features.shape[0]
    # Batch tile: 16-row granule (bf16 sublane packing) up to 128 rows.
    TB = min(128, _round_up(B, 16))
    B_pad = _round_up(B, TB)

    img = image_features.astype(jnp.bfloat16)
    txt = text_features.astype(jnp.bfloat16)
    if B_pad != B:
        pad = ((0, B_pad - B), (0, 0))
        img = jnp.pad(img, pad)
        txt = jnp.pad(txt, pad)

    flops = 2 * B_pad * (D_FEAT * D_H1 * 2 + D_H1 * D_H2 + D_H2 * D_OUT_PAD)
    bytes_accessed = (2 * B_pad * D_FEAT * 2                # bf16 inputs
                      + (2 * D_FEAT * D_H1 + D_H1 * D_H2 + D_H2 * D_OUT_PAD) * 2
                      + (D_H1 + D_H2 + D_OUT_PAD) * 4       # f32 biases
                      + B_pad * D_OUT_PAD * 4)              # f32 output

    out = pl.pallas_call(
        _classifier_kernel,
        out_shape=jax.ShapeDtypeStruct((B_pad, D_OUT_PAD), jnp.float32),
        grid=(B_pad // TB,),
        in_specs=[
            pl.BlockSpec((TB, D_FEAT), lambda i: (i, 0)),       # image features
            pl.BlockSpec((TB, D_FEAT), lambda i: (i, 0)),       # text features
            pl.BlockSpec((D_FEAT, D_H1), lambda i: (0, 0)),     # w1a (resident)
            pl.BlockSpec((D_FEAT, D_H1), lambda i: (0, 0)),     # w1b (resident)
            pl.BlockSpec((1, D_H1), lambda i: (0, 0)),          # b1
            pl.BlockSpec((D_H1, D_H2), lambda i: (0, 0)),       # w2
            pl.BlockSpec((1, D_H2), lambda i: (0, 0)),          # b2
            pl.BlockSpec((D_H2, D_OUT_PAD), lambda i: (0, 0)),  # w3 (padded)
            pl.BlockSpec((1, D_OUT_PAD), lambda i: (0, 0)),     # b3 (padded)
        ],
        out_specs=pl.BlockSpec((TB, D_OUT_PAD), lambda i: (i, 0)),
        compiler_params=pltpu.CompilerParams(
            dimension_semantics=("parallel",)),
        cost_estimate=pl.CostEstimate(flops=flops, transcendentals=0,
                                      bytes_accessed=bytes_accessed),
    )(img, txt,
      params["w1a"], params["w1b"], params["b1"],
      params["w2"], params["b2"],
      params["w3p"], params["b3p"])
    return out[:B, 0:1]


# -------------------- Frozen CLIP encoders: deterministic stand-ins --------
# TODO(synk): clip_model.encode_image / encode_text are an external frozen
# network; replaced with deterministic linear stand-ins producing 512-dim f32
# features (same shape/dtype contract as the PyTorch module).
def encode_image_stub(images, w_img):
    B = images.shape[0]
    flat = images.reshape(B, -1).astype(jnp.float32)        # NCHW flattened
    return flat @ w_img                                      # (B, 512)


def encode_text_stub(texts, emb_table, w_txt):
    emb = emb_table[texts]                                   # (B, T, 512)
    pooled = emb.mean(axis=1)                                # (B, 512)
    return pooled @ w_txt                                    # (B, 512)


# -------------------- Full module forward ----------------------------------
def disdrive_forward(images, texts, params):
    image_features = encode_image_stub(images, params["w_img"])
    text_features = encode_text_stub(texts, params["emb_table"], params["w_txt"])
    # torch.cat is fused into the kernel (split-weight first layer).
    return classifier_forward(image_features, text_features, params)


def init_params(key, img_flat_dim, vocab):
    ks = jax.random.split(key, 8)
    s = 0.02
    w1 = s * jax.random.normal(ks[3], (2 * D_FEAT, D_H1), jnp.float32)
    w3 = s * jax.random.normal(ks[5], (D_H2, 1), jnp.float32)
    b3 = jnp.zeros((1, 1), jnp.float32)
    # Pad Linear(256,1) out to 128 lanes ONCE (column 0 holds the logit).
    w3p = jnp.zeros((D_H2, D_OUT_PAD), jnp.float32).at[:, 0:1].set(w3)
    b3p = jnp.zeros((1, D_OUT_PAD), jnp.float32).at[:, 0:1].set(b3)
    return {
        # stand-in encoders (f32)
        "w_img": s * jax.random.normal(ks[0], (img_flat_dim, D_FEAT), jnp.float32),
        "emb_table": s * jax.random.normal(ks[1], (vocab, D_FEAT), jnp.float32),
        "w_txt": s * jax.random.normal(ks[2], (D_FEAT, D_FEAT), jnp.float32),
        # classifier: bf16 weights (f32 MXU accumulation), f32 biases
        "w1a": w1[:D_FEAT].astype(jnp.bfloat16),
        "w1b": w1[D_FEAT:].astype(jnp.bfloat16),
        "b1": jnp.zeros((1, D_H1), jnp.float32),
        "w2": (s * jax.random.normal(ks[4], (D_H1, D_H2), jnp.float32)
               ).astype(jnp.bfloat16),
        "b2": jnp.zeros((1, D_H2), jnp.float32),
        "w3p": w3p.astype(jnp.bfloat16),
        "b3p": b3p,
    }


if __name__ == "__main__":
    key = jax.random.PRNGKey(0)
    k_img, k_txt, k_par = jax.random.split(key, 3)

    B, C, H, W = 2, 3, 16, 16
    T, VOCAB = 8, 64

    images = jax.random.normal(k_img, (B, C, H, W), jnp.float32)  # NCHW like PyTorch
    texts = jax.random.randint(k_txt, (B, T), 0, VOCAB, jnp.int32)

    params = init_params(k_par, C * H * W, VOCAB)

    out = disdrive_forward(images, texts, params)
    out = jax.block_until_ready(out)
    assert out.shape == (B, 1) and out.dtype == jnp.float32

    # pure-JAX reference with the same bf16 weights / f32 accumulation
    img_f = encode_image_stub(images, params["w_img"]).astype(jnp.bfloat16)
    txt_f = encode_text_stub(texts, params["emb_table"], params["w_txt"]).astype(jnp.bfloat16)
    h1 = jnp.maximum(
        jnp.dot(img_f, params["w1a"], preferred_element_type=jnp.float32)
        + jnp.dot(txt_f, params["w1b"], preferred_element_type=jnp.float32)
        + params["b1"], 0.0)
    h2 = jnp.maximum(
        jnp.dot(h1.astype(jnp.bfloat16), params["w2"],
                preferred_element_type=jnp.float32) + params["b2"], 0.0)
    ref = (jnp.dot(h2.astype(jnp.bfloat16), params["w3p"],
                   preferred_element_type=jnp.float32) + params["b3p"])[:, 0:1]
    assert jnp.allclose(out, ref, atol=5e-3, rtol=5e-3)

    print("KERNEL_OK")
</pallas_src>

<mosaic_0001>
module attributes {stable_mosaic.version = 11 : i64} {
  func.func @_classifier_kernel(%arg0: i32, %arg1: memref<16x512xbf16, #tpu.memory_space<vmem>>, %arg2: memref<16x512xbf16, #tpu.memory_space<vmem>>, %arg3: memref<512x512xbf16, #tpu.memory_space<vmem>>, %arg4: memref<512x512xbf16, #tpu.memory_space<vmem>>, %arg5: memref<1x512xf32, #tpu.memory_space<vmem>>, %arg6: memref<512x256xbf16, #tpu.memory_space<vmem>>, %arg7: memref<1x256xf32, #tpu.memory_space<vmem>>, %arg8: memref<256x128xbf16, #tpu.memory_space<vmem>>, %arg9: memref<1x128xf32, #tpu.memory_space<vmem>>, %arg10: memref<16x128xf32, #tpu.memory_space<vmem>>) attributes {dimension_semantics = [#tpu.dimension_semantics<parallel>], iteration_bounds = array<i64: 1>, scalar_prefetch = 0 : i64, scratch_operands = 0 : i64, tpu.core_type = #tpu.core_type<tc>, window_params = [{transform_indices = @transform_0, window_bounds = array<i64: 16, 512>}, {transform_indices = @transform_1, window_bounds = array<i64: 16, 512>}, {pipeline_mode = #tpu.pipeline_mode<synchronous>, transform_indices = @transform_2, window_bounds = array<i64: 512, 512>}, {pipeline_mode = #tpu.pipeline_mode<synchronous>, transform_indices = @transform_3, window_bounds = array<i64: 512, 512>}, {pipeline_mode = #tpu.pipeline_mode<synchronous>, transform_indices = @transform_4, window_bounds = array<i64: 1, 512>}, {pipeline_mode = #tpu.pipeline_mode<synchronous>, transform_indices = @transform_5, window_bounds = array<i64: 512, 256>}, {pipeline_mode = #tpu.pipeline_mode<synchronous>, transform_indices = @transform_6, window_bounds = array<i64: 1, 256>}, {pipeline_mode = #tpu.pipeline_mode<synchronous>, transform_indices = @transform_7, window_bounds = array<i64: 256, 128>}, {pipeline_mode = #tpu.pipeline_mode<synchronous>, transform_indices = @transform_8, window_bounds = array<i64: 1, 128>}, {transform_indices = @transform_9, window_bounds = array<i64: 16, 128>}]} {
    %c0 = arith.constant 0 : index
    %c0_0 = arith.constant 0 : index
    %0 = vector.load %arg1[%c0, %c0_0] : memref<16x512xbf16, #tpu.memory_space<vmem>>, vector<16x512xbf16>
    %c0_1 = arith.constant 0 : index
    %c0_2 = arith.constant 0 : index
    %1 = vector.load %arg2[%c0_1, %c0_2] : memref<16x512xbf16, #tpu.memory_space<vmem>>, vector<16x512xbf16>
    %c0_3 = arith.constant 0 : index
    %c0_4 = arith.constant 0 : index
    %2 = vector.load %arg3[%c0_3, %c0_4] : memref<512x512xbf16, #tpu.memory_space<vmem>>, vector<512x512xbf16>
    %cst = arith.constant dense<0.000000e+00> : vector<16x512xf32>
    %3 = tpu.matmul %0, %2, %cst {dimension_numbers = #tpu.dot_dimension_numbers<[1], [0], [0], [1], [0, 0, 1, 1], [], []>} : vector<16x512xbf16>, vector<512x512xbf16>, vector<16x512xf32> -> vector<16x512xf32>
    %c0_5 = arith.constant 0 : index
    %c0_6 = arith.constant 0 : index
    %4 = vector.load %arg4[%c0_5, %c0_6] : memref<512x512xbf16, #tpu.memory_space<vmem>>, vector<512x512xbf16>
    %cst_7 = arith.constant dense<0.000000e+00> : vector<16x512xf32>
    %5 = tpu.matmul %1, %4, %cst_7 {dimension_numbers = #tpu.dot_dimension_numbers<[1], [0], [0], [1], [0, 0, 1, 1], [], []>} : vector<16x512xbf16>, vector<512x512xbf16>, vector<16x512xf32> -> vector<16x512xf32>
    %6 = arith.addf %3, %5 : vector<16x512xf32>
    %c0_8 = arith.constant 0 : index
    %c0_9 = arith.constant 0 : index
    %7 = vector.load %arg5[%c0_8, %c0_9] : memref<1x512xf32, #tpu.memory_space<vmem>>, vector<1x512xf32>
    %8 = vector.broadcast %7 : vector<1x512xf32> to vector<16x512xf32>
    %9 = arith.addf %6, %8 : vector<16x512xf32>
    %cst_10 = arith.constant 0.000000e+00 : f32
    %10 = vector.broadcast %cst_10 : f32 to vector<16x512xf32>
    %11 = arith.maximumf %9, %10 : vector<16x512xf32>
    %12 = arith.truncf %11 : vector<16x512xf32> to vector<16x512xbf16>
    %c0_11 = arith.constant 0 : index
    %c0_12 = arith.constant 0 : index
    %13 = vector.load %arg6[%c0_11, %c0_12] : memref<512x256xbf16, #tpu.memory_space<vmem>>, vector<512x256xbf16>
    %cst_13 = arith.constant dense<0.000000e+00> : vector<16x256xf32>
    %14 = tpu.matmul %12, %13, %cst_13 {dimension_numbers = #tpu.dot_dimension_numbers<[1], [0], [0], [1], [0, 0, 1, 1], [], []>} : vector<16x512xbf16>, vector<512x256xbf16>, vector<16x256xf32> -> vector<16x256xf32>
    %c0_14 = arith.constant 0 : index
    %c0_15 = arith.constant 0 : index
    %15 = vector.load %arg7[%c0_14, %c0_15] : memref<1x256xf32, #tpu.memory_space<vmem>>, vector<1x256xf32>
    %16 = vector.broadcast %15 : vector<1x256xf32> to vector<16x256xf32>
    %17 = arith.addf %14, %16 : vector<16x256xf32>
    %cst_16 = arith.constant 0.000000e+00 : f32
    %18 = vector.broadcast %cst_16 : f32 to vector<16x256xf32>
    %19 = arith.maximumf %17, %18 : vector<16x256xf32>
    %20 = arith.truncf %19 : vector<16x256xf32> to vector<16x256xbf16>
    %c0_17 = arith.constant 0 : index
    %c0_18 = arith.constant 0 : index
    %21 = vector.load %arg8[%c0_17, %c0_18] : memref<256x128xbf16, #tpu.memory_space<vmem>>, vector<256x128xbf16>
    %cst_19 = arith.constant dense<0.000000e+00> : vector<16x128xf32>
    %22 = tpu.matmul %20, %21, %cst_19 {dimension_numbers = #tpu.dot_dimension_numbers<[1], [0], [0], [1], [0, 0, 1, 1], [], []>} : vector<16x256xbf16>, vector<256x128xbf16>, vector<16x128xf32> -> vector<16x128xf32>
    %c0_20 = arith.constant 0 : index
    %c0_21 = arith.constant 0 : index
    %23 = vector.load %arg9[%c0_20, %c0_21] : memref<1x128xf32, #tpu.memory_space<vmem>>, vector<1x128xf32>
    %24 = vector.broadcast %23 : vector<1x128xf32> to vector<16x128xf32>
    %25 = arith.addf %22, %24 : vector<16x128xf32>
    %c0_22 = arith.constant 0 : index
    %c0_23 = arith.constant 0 : index
    %26 = vector.load %arg10[%c0_22, %c0_23] : memref<16x128xf32, #tpu.memory_space<vmem>>, vector<16x128xf32>
    tpu.vector_store %arg10[%c0_22, %c0_23], %25 {strides = array<i32>} : memref<16x128xf32, #tpu.memory_space<vmem>>, vector<16x128xf32>,
    return
  }
  func.func @transform_0(%arg0: i32) -> (i32, i32) {
    %c0_i32 = arith.constant 0 : i32
    %c0_i32_0 = arith.constant 0 : i32
    return %arg0, %c0_i32 : i32, i32
  }
  func.func @transform_1(%arg0: i32) -> (i32, i32) {
    %c0_i32 = arith.constant 0 : i32
    %c0_i32_0 = arith.constant 0 : i32
    return %arg0, %c0_i32 : i32, i32
  }
  func.func @transform_2(%arg0: i32) -> (i32, i32) {
    %c0_i32 = arith.constant 0 : i32
    %c0_i32_0 = arith.constant 0 : i32
    %c0_i32_1 = arith.constant 0 : i32
    return %c0_i32, %c0_i32_0 : i32, i32
  }
  func.func @transform_3(%arg0: i32) -> (i32, i32) {
    %c0_i32 = arith.constant 0 : i32
    %c0_i32_0 = arith.constant 0 : i32
    %c0_i32_1 = arith.constant 0 : i32
    return %c0_i32, %c0_i32_0 : i32, i32
  }
  func.func @transform_4(%arg0: i32) -> (i32, i32) {
    %c0_i32 = arith.constant 0 : i32
    %c0_i32_0 = arith.constant 0 : i32
    %c0_i32_1 = arith.constant 0 : i32
    return %c0_i32, %c0_i32_0 : i32, i32
  }
  func.func @transform_5(%arg0: i32) -> (i32, i32) {
    %c0_i32 = arith.constant 0 : i32
    %c0_i32_0 = arith.constant 0 : i32
    %c0_i32_1 = arith.constant 0 : i32
    return %c0_i32, %c0_i32_0 : i32, i32
  }
  func.func @transform_6(%arg0: i32) -> (i32, i32) {
    %c0_i32 = arith.constant 0 : i32
    %c0_i32_0 = arith.constant 0 : i32
    %c0_i32_1 = arith.constant 0 : i32
    return %c0_i32, %c0_i32_0 : i32, i32
  }
  func.func @transform_7(%arg0: i32) -> (i32, i32) {
    %c0_i32 = arith.constant 0 : i32
    %c0_i32_0 = arith.constant 0 : i32
    %c0_i32_1 = arith.constant 0 : i32
    return %c0_i32, %c0_i32_0 : i32, i32
  }
  func.func @transform_8(%arg0: i32) -> (i32, i32) {
    %c0_i32 = arith.constant 0 : i32
    %c0_i32_0 = arith.constant 0 : i32
    %c0_i32_1 = arith.constant 0 : i32
    return %c0_i32, %c0_i32_0 : i32, i32
  }
  func.func @transform_9(%arg0: i32) -> (i32, i32) {
    %c0_i32 = arith.constant 0 : i32
    %c0_i32_0 = arith.constant 0 : i32
    return %arg0, %c0_i32 : i32, i32
  }
}

</mosaic_0001>

<llo_original>
// kernel: tpu_custom_call.1
$region0: #{tpu_custom_call.1}
  #allocation0 [shape = 'u32[]', space=smem, size = 0x4, offset = 0x4, fixed_abs, tag = 'smem constant byte address 0x4 - core index']
  #allocation1 [shape = 'u32[144,128]{1,0:T(1,128)}', space=vmem, size = 0x12000, scoped, tag = 'internal scratch']
  %s0 = inlined_call_operand.hbm [shape: bf16[16,512], index: 0, kind: input, shape index: {}]
  %s1 = inlined_call_operand.hbm [shape: bf16[16,512], index: 1, kind: input, shape index: {}]
  %s2 = inlined_call_operand.hbm [shape: bf16[512,512], index: 2, kind: input, shape index: {}]
  %s3 = inlined_call_operand.hbm [shape: bf16[512,512], index: 3, kind: input, shape index: {}]
  %s4 = inlined_call_operand.vmem [shape: f32[1,512], index: 4, kind: input, shape index: {}]
  %s5 = inlined_call_operand.hbm [shape: bf16[512,256], index: 5, kind: input, shape index: {}]
  %s6 = inlined_call_operand.vmem [shape: f32[1,256], index: 6, kind: input, shape index: {}]
  %s7 = inlined_call_operand.hbm [shape: bf16[256,128], index: 7, kind: input, shape index: {}]
  %s8 = inlined_call_operand.vmem [shape: f32[1,128], index: 8, kind: input, shape index: {}]
  %s9 = inlined_call_operand.hbm [shape: f32[16,128], index: 9, kind: output, shape index: {}]
  %s10 = sld [smem:[#allocation0]]
  $region70: #{tpu_custom_call.1} parent=0
    _
  %s12 = ssub.s32 1, %s10
  %s13 = scalar_select 0, %s12, %s10
  $region1: #{tpu_custom_call.1} parent=0
    #allocation2 [shape = 'u8[16384]{0}', space=vmem, size = 0x4000, scoped, tag = 'input window, operand 0, single buffered']
    #allocation3 [shape = 's32[1]{0}', space=sflag, size = 0x4, scoped, tag = 'scoped memory for tpu_custom_call.1']
    #allocation4 [shape = 's32[1]{0}', space=sflag, size = 0x4, scoped, tag = 'scoped memory for tpu_custom_call.1']
    #allocation5 [shape = 'u8[16384]{0}', space=vmem, size = 0x4000, scoped, tag = 'input window, operand 1, single buffered']
    #allocation6 [shape = 's32[1]{0}', space=sflag, size = 0x4, scoped, tag = 'scoped memory for tpu_custom_call.1']
    #allocation7 [shape = 'u8[524288]{0}', space=vmem, size = 0x80000, scoped, tag = 'input window, operand 2, single buffered']
    #allocation8 [shape = 'u8[524288]{0}', space=vmem, size = 0x80000, scoped, tag = 'input window, operand 3, single buffered']
    #allocation9 [shape = 's32[1]{0}', space=sflag, size = 0x4, scoped, tag = 'scoped memory for tpu_custom_call.1']
    #allocation10 [shape = 'u8[262144]{0}', space=vmem, size = 0x40000, scoped, tag = 'input window, operand 5, single buffered']
    #allocation11 [shape = 'u8[65536]{0}', space=vmem, size = 0x10000, scoped, tag = 'input window, operand 7, single buffered']
    #allocation12 [shape = 's32[1]{0}', space=sflag, size = 0x4, scoped, tag = 'scoped memory for tpu_custom_call.1']
    #allocation13 [shape = 'u8[8192]{0}', space=vmem, size = 0x2000, scoped, tag = 'output window, operand 0, single buffered']
    %14 = vsyncpa [#allocation3], 0
    %15 = vsyncpa [#allocation6], 0
    %16 = vsyncpa [#allocation9], 0
    %17 = vsyncpa [#allocation12], 0
    %18 = vsyncpa [#allocation4], 0
    // Predicated region
    $region2: #{tpu_custom_call.1} parent=1 // pred_check
      _
    $region3: #{tpu_custom_call.1} parent=1 // pred_check_branch
      %20 = sbr.rel (0) target = $region5
    $region4: #{tpu_custom_call.1} parent=1 // pred_region
      %s22 = ssub.s32 512, 512
      %23 = vsyncadd [#allocation3], %s22
      %s24 = sshll.u32 [#allocation2], 4
      %s25 = int_to_ptr.vmem [resolvable:$true] %s24
      %30 = dma.hbm_to_vmem [thread:$0]  %s0, 512, %s25, [#allocation3], 256, 256, 16
    $region5: #{tpu_custom_call.1} parent=1 // pred_fallthru
      _
    // Predicated region
    $region6: #{tpu_custom_call.1} parent=1 // pred_check
      _
    $region7: #{tpu_custom_call.1} parent=1 // pred_check_branch
      %32 = sbr.rel (0) target = $region9
    $region8: #{tpu_custom_call.1} parent=1 // pred_region
      %s34 = ssub.s32 512, 512
      %35 = vsyncadd [#allocation6], %s34
      %s36 = sshll.u32 [#allocation5], 4
      %s37 = int_to_ptr.vmem [resolvable:$true] %s36
      %42 = dma.hbm_to_vmem [thread:$0]  %s1, 512, %s37, [#allocation6], 256, 256, 16
    $region9: #{tpu_custom_call.1} parent=1 // pred_fallthru
      _
    // Predicated region
    $region10: #{tpu_custom_call.1} parent=1 // pred_check
      _
    $region11: #{tpu_custom_call.1} parent=1 // pred_check_branch
      %44 = sbr.rel (0) target = $region13
    $region12: #{tpu_custom_call.1} parent=1 // pred_region
      %s46 = ssub.s32 16384, 16384
      %47 = vsyncadd [#allocation6], %s46
      %s48 = sshll.u32 [#allocation7], 4
      %s49 = int_to_ptr.vmem [resolvable:$true] %s48
      %54 = dma.hbm_to_vmem [thread:$0]  %s2, 16384, %s49, [#allocation6], 256, 256, 16
    $region13: #{tpu_custom_call.1} parent=1 // pred_fallthru
      _
    // Predicated region
    $region14: #{tpu_custom_call.1} parent=1 // pred_check
      _
    $region15: #{tpu_custom_call.1} parent=1 // pred_check_branch
      %56 = sbr.rel (0) target = $region17
    $region16: #{tpu_custom_call.1} parent=1 // pred_region
      %s58 = ssub.s32 16384, 16384
      %59 = vsyncadd [#allocation9], %s58
      %s60 = sshll.u32 [#allocation8], 4
      %s61 = int_to_ptr.vmem [resolvable:$true] %s60
      %66 = dma.hbm_to_vmem [thread:$0]  %s3, 16384, %s61, [#allocation9], 256, 256, 16
    $region17: #{tpu_custom_call.1} parent=1 // pred_fallthru
      _
    // Predicated region
    $region18: #{tpu_custom_call.1} parent=1 // pred_check
      _
    $region19: #{tpu_custom_call.1} parent=1 // pred_check_branch
      %68 = sbr.rel (0) target = $region21
    $region20: #{tpu_custom_call.1} parent=1 // pred_region
      _
    $region21: #{tpu_custom_call.1} parent=1 // pred_fallthru
      _
    // Predicated region
    $region22: #{tpu_custom_call.1} parent=1 // pred_check
      _
    $region23: #{tpu_custom_call.1} parent=1 // pred_check_branch
      %70 = sbr.rel (0) target = $region25
    $region24: #{tpu_custom_call.1} parent=1 // pred_region
      %s72 = ssub.s32 8192, 8192
      %73 = vsyncadd [#allocation9], %s72
      %s74 = sshll.u32 [#allocation10], 4
      %s75 = int_to_ptr.vmem [resolvable:$true] %s74
      %80 = dma.hbm_to_vmem [thread:$0]  %s5, 8192, %s75, [#allocation9], 128, 128, 8
    $region25: #{tpu_custom_call.1} parent=1 // pred_fallthru
      _
    // Predicated region
    $region26: #{tpu_custom_call.1} parent=1 // pred_check
      _
    $region27: #{tpu_custom_call.1} parent=1 // pred_check_branch
      %82 = sbr.rel (0) target = $region29
    $region28: #{tpu_custom_call.1} parent=1 // pred_region
      _
    $region29: #{tpu_custom_call.1} parent=1 // pred_fallthru
      _
    // Predicated region
    $region30: #{tpu_custom_call.1} parent=1 // pred_check
      _
    $region31: #{tpu_custom_call.1} parent=1 // pred_check_branch
      %84 = sbr.rel (0) target = $region33
    $region32: #{tpu_custom_call.1} parent=1 // pred_region
      %s86 = ssub.s32 2048, 2048
      %87 = vsyncadd [#allocation12], %s86
      %s88 = sshll.u32 [#allocation11], 4
      %s89 = int_to_ptr.vmem [resolvable:$true] %s88
      %94 = dma.hbm_to_vmem [thread:$0]  %s7, 2048, %s89, [#allocation12], 64, 64, 4
    $region33: #{tpu_custom_call.1} parent=1 // pred_fallthru
      _
    // Predicated region
    $region34: #{tpu_custom_call.1} parent=1 // pred_check
      _
    $region35: #{tpu_custom_call.1} parent=1 // pred_check_branch
      %96 = sbr.rel (0) target = $region37
    $region36: #{tpu_custom_call.1} parent=1 // pred_region
      _
    $region37: #{tpu_custom_call.1} parent=1 // pred_fallthru
      _
    // Predicated region
    $region38: #{tpu_custom_call.1} parent=1 // pred_check
      _
    $region39: #{tpu_custom_call.1} parent=1 // pred_check_branch
      %98 = sbr.rel (0) target = $region41
    $region40: #{tpu_custom_call.1} parent=1 // pred_region
      %99 = dma.done [#allocation3], 512
    $region41: #{tpu_custom_call.1} parent=1 // pred_fallthru
      _
    // Predicated region
    $region42: #{tpu_custom_call.1} parent=1 // pred_check
      _
    $region43: #{tpu_custom_call.1} parent=1 // pred_check_branch
      %101 = sbr.rel (0) target = $region45
    $region44: #{tpu_custom_call.1} parent=1 // pred_region
      %102 = dma.done [#allocation6], 512
    $region45: #{tpu_custom_call.1} parent=1 // pred_fallthru
      _
    // Predicated region
    $region46: #{tpu_custom_call.1} parent=1 // pred_check
      _
    $region47: #{tpu_custom_call.1} parent=1 // pred_check_branch
      %104 = sbr.rel (0) target = $region49
    $region48: #{tpu_custom_call.1} parent=1 // pred_region
      %105 = dma.done [#allocation6], 16384
    $region49: #{tpu_custom_call.1} parent=1 // pred_fallthru
      _
    // Predicated region
    $region50: #{tpu_custom_call.1} parent=1 // pred_check
      _
    $region51: #{tpu_custom_call.1} parent=1 // pred_check_branch
      %107 = sbr.rel (0) target = $region53
    $region52: #{tpu_custom_call.1} parent=1 // pred_region
      %108 = dma.done [#allocation9], 16384
    $region53: #{tpu_custom_call.1} parent=1 // pred_fallthru
      _
    // Predicated region
    $region54: #{tpu_custom_call.1} parent=1 // pred_check
      _
    $region55: #{tpu_custom_call.1} parent=1 // pred_check_branch
      %110 = sbr.rel (0) target = $region57
    $region56: #{tpu_custom_call.1} parent=1 // pred_region
      %111 = dma.done [#allocation9], 8192
    $region57: #{tpu_custom_call.1} parent=1 // pred_fallthru
      _
    // Predicated region
    $region58: #{tpu_custom_call.1} parent=1 // pred_check
      _
    $region59: #{tpu_custom_call.1} parent=1 // pred_check_branch
      %113 = sbr.rel (0) target = $region61
    $region60: #{tpu_custom_call.1} parent=1 // pred_region
      %114 = dma.done [#allocation12], 2048
    $region61: #{tpu_custom_call.1} parent=1 // pred_fallthru
      _
    %v116 = vld [vmem:[#allocation2] sm:$0xff]
    %v117 = vld [vmem:[#allocation2 + $0x8] sm:$0xff]
    %v118 = vld [vmem:[#allocation2 + $0x10] sm:$0xff]
    %v119 = vld [vmem:[#allocation2 + $0x18] sm:$0xff]
    %v120 = vld [vmem:[#allocation5] sm:$0xff]
    %v121 = vld [vmem:[#allocation5 + $0x8] sm:$0xff]
    %v122 = vld [vmem:[#allocation5 + $0x10] sm:$0xff]
    %v123 = vld [vmem:[#allocation5 + $0x18] sm:$0xff]
    %v124 = vld [vmem:[#allocation7] sm:$0xff]
    %v125 = vld [vmem:[#allocation7 + $0x8] sm:$0xff]
    %v126 = vld [vmem:[#allocation7 + $0x10] sm:$0xff]
    %v127 = vld [vmem:[#allocation7 + $0x18] sm:$0xff]
    %v128 = vld [vmem:[#allocation7 + $0x20] sm:$0xff]
    %v129 = vld [vmem:[#allocation7 + $0x28] sm:$0xff]
    %v130 = vld [vmem:[#allocation7 + $0x30] sm:$0xff]
    %v131 = vld [vmem:[#allocation7 + $0x38] sm:$0xff]
    %v132 = vld [vmem:[#allocation7 + $0x40] sm:$0xff]
    %v133 = vld [vmem:[#allocation7 + $0x48] sm:$0xff]
    %v134 = vld [vmem:[#allocation7 + $0x50] sm:$0xff]
    %v135 = vld [vmem:[#allocation7 + $0x58] sm:$0xff]
    %v136 = vld [vmem:[#allocation7 + $0x60] sm:$0xff]
    %v137 = vld [vmem:[#allocation7 + $0x68] sm:$0xff]
    %v138 = vld [vmem:[#allocation7 + $0x70] sm:$0xff]
    %v139 = vld [vmem:[#allocation7 + $0x78] sm:$0xff]
    %v140 = vld [vmem:[#allocation7 + $0x80] sm:$0xff]
    %v141 = vld [vmem:[#allocation7 + $0x88] sm:$0xff]
    %v142 = vld [vmem:[#allocation7 + $0x90] sm:$0xff]
    %v143 = vld [vmem:[#allocation7 + $0x98] sm:$0xff]
    %v144 = vld [vmem:[#allocation7 + $0xa0] sm:$0xff]
    %v145 = vld [vmem:[#allocation7 + $0xa8] sm:$0xff]
    %v146 = vld [vmem:[#allocation7 + $0xb0] sm:$0xff]
    %v147 = vld [vmem:[#allocation7 + $0xb8] sm:$0xff]
    %v148 = vld [vmem:[#allocation7 + $0xc0] sm:$0xff]
    %v149 = vld [vmem:[#allocation7 + $0xc8] sm:$0xff]
    %v150 = vld [vmem:[#allocation7 + $0xd0] sm:$0xff]
    %v151 = vld [vmem:[#allocation7 + $0xd8] sm:$0xff]
    %v152 = vld [vmem:[#allocation7 + $0xe0] sm:$0xff]
    %v153 = vld [vmem:[#allocation7 + $0xe8] sm:$0xff]
    %v154 = vld [vmem:[#allocation7 + $0xf0] sm:$0xff]
    %v155 = vld [vmem:[#allocation7 + $0xf8] sm:$0xff]
    %v156 = vld [vmem:[#allocation7 + $0x100] sm:$0xff]
    %v157 = vld [vmem:[#allocation7 + $0x108] sm:$0xff]
    %v158 = vld [vmem:[#allocation7 + $0x110] sm:$0xff]
    %v159 = vld [vmem:[#allocation7 + $0x118] sm:$0xff]
    %v160 = vld [vmem:[#allocation7 + $0x120] sm:$0xff]
    %v161 = vld [vmem:[#allocation7 + $0x128] sm:$0xff]
    %v162 = vld [vmem:[#allocation7 + $0x130] sm:$0xff]
    %v163 = vld [vmem:[#allocation7 + $0x138] sm:$0xff]
    %v164 = vld [vmem:[#allocation7 + $0x140] sm:$0xff]
    %v165 = vld [vmem:[#allocation7 + $0x148] sm:$0xff]
    %v166 = vld [vmem:[#allocation7 + $0x150] sm:$0xff]
    %v167 = vld [vmem:[#allocation7 + $0x158] sm:$0xff]
    %v168 = vld [vmem:[#allocation7 + $0x160] sm:$0xff]
    %v169 = vld [vmem:[#allocation7 + $0x168] sm:$0xff]
    %v170 = vld [vmem:[#allocation7 + $0x170] sm:$0xff]
    %v171 = vld [vmem:[#allocation7 + $0x178] sm:$0xff]
    %v172 = vld [vmem:[#allocation7 + $0x180] sm:$0xff]
    %v173 = vld [vmem:[#allocation7 + $0x188] sm:$0xff]
    %v174 = vld [vmem:[#allocation7 + $0x190] sm:$0xff]
    %v175 = vld [vmem:[#allocation7 + $0x198] sm:$0xff]
    %v176 = vld [vmem:[#allocation7 + $0x1a0] sm:$0xff]
    %v177 = vld [vmem:[#allocation7 + $0x1a8] sm:$0xff]
    %v178 = vld [vmem:[#allocation7 + $0x1b0] sm:$0xff]
    %v179 = vld [vmem:[#allocation7 + $0x1b8] sm:$0xff]
    %v180 = vld [vmem:[#allocation7 + $0x1c0] sm:$0xff]
    %v181 = vld [vmem:[#allocation7 + $0x1c8] sm:$0xff]
    %v182 = vld [vmem:[#allocation7 + $0x1d0] sm:$0xff]
    %v183 = vld [vmem:[#allocation7 + $0x1d8] sm:$0xff]
    %v184 = vld [vmem:[#allocation7 + $0x1e0] sm:$0xff]
    %v185 = vld [vmem:[#allocation7 + $0x1e8] sm:$0xff]
    %v186 = vld [vmem:[#allocation7 + $0x1f0] sm:$0xff]
    %v187 = vld [vmem:[#allocation7 + $0x1f8] sm:$0xff]
    %v188 = vld [vmem:[#allocation7 + $0x200] sm:$0xff]
    %v189 = vld [vmem:[#allocation7 + $0x208] sm:$0xff]
    %v190 = vld [vmem:[#allocation7 + $0x210] sm:$0xff]
    %v191 = vld [vmem:[#allocation7 + $0x218] sm:$0xff]
    %v192 = vld [vmem:[#allocation7 + $0x220] sm:$0xff]
    %v193 = vld [vmem:[#allocation7 + $0x228] sm:$0xff]
    %v194 = vld [vmem:[#allocation7 + $0x230] sm:$0xff]
    %v195 = vld [vmem:[#allocation7 + $0x238] sm:$0xff]
    %v196 = vld [vmem:[#allocation7 + $0x240] sm:$0xff]
    %v197 = vld [vmem:[#allocation7 + $0x248] sm:$0xff]
    %v198 = vld [vmem:[#allocation7 + $0x250] sm:$0xff]
    %v199 = vld [vmem:[#allocation7 + $0x258] sm:$0xff]
    %v200 = vld [vmem:[#allocation7 + $0x260] sm:$0xff]
    %v201 = vld [vmem:[#allocation7 + $0x268] sm:$0xff]
    %v202 = vld [vmem:[#allocation7 + $0x270] sm:$0xff]
    %v203 = vld [vmem:[#allocation7 + $0x278] sm:$0xff]
    %v204 = vld [vmem:[#allocation7 + $0x280] sm:$0xff]
    %v205 = vld [vmem:[#allocation7 + $0x288] sm:$0xff]
    %v206 = vld [vmem:[#allocation7 + $0x290] sm:$0xff]
    %v207 = vld [vmem:[#allocation7 + $0x298] sm:$0xff]
    %v208 = vld [vmem:[#allocation7 + $0x2a0] sm:$0xff]
    %v209 = vld [vmem:[#allocation7 + $0x2a8] sm:$0xff]
    %v210 = vld [vmem:[#allocation7 + $0x2b0] sm:$0xff]
    %v211 = vld [vmem:[#allocation7 + $0x2b8] sm:$0xff]
    %v212 = vld [vmem:[#allocation7 + $0x2c0] sm:$0xff]
    %v213 = vld [vmem:[#allocation7 + $0x2c8] sm:$0xff]
    %v214 = vld [vmem:[#allocation7 + $0x2d0] sm:$0xff]
    %v215 = vld [vmem:[#allocation7 + $0x2d8] sm:$0xff]
    %v216 = vld [vmem:[#allocation7 + $0x2e0] sm:$0xff]
    %v217 = vld [vmem:[#allocation7 + $0x2e8] sm:$0xff]
    %v218 = vld [vmem:[#allocation7 + $0x2f0] sm:$0xff]
    %v219 = vld [vmem:[#allocation7 + $0x2f8] sm:$0xff]
    %v220 = vld [vmem:[#allocation7 + $0x300] sm:$0xff]
    %v221 = vld [vmem:[#allocation7 + $0x308] sm:$0xff]
    %v222 = vld [vmem:[#allocation7 + $0x310] sm:$0xff]
    %v223 = vld [vmem:[#allocation7 + $0x318] sm:$0xff]
    %v224 = vld [vmem:[#allocation7 + $0x320] sm:$0xff]
    %v225 = vld [vmem:[#allocation7 + $0x328] sm:$0xff]
    %v226 = vld [vmem:[#allocation7 + $0x330] sm:$0xff]
    %v227 = vld [vmem:[#allocation7 + $0x338] sm:$0xff]
    %v228 = vld [vmem:[#allocation7 + $0x340] sm:$0xff]
    %v229 = vld [vmem:[#allocation7 + $0x348] sm:$0xff]
    %v230 = vld [vmem:[#allocation7 + $0x350] sm:$0xff]
    %v231 = vld [vmem:[#allocation7 + $0x358] sm:$0xff]
    %v232 = vld [vmem:[#allocation7 + $0x360] sm:$0xff]
    %v233 = vld [vmem:[#allocation7 + $0x368] sm:$0xff]
    %v234 = vld [vmem:[#allocation7 + $0x370] sm:$0xff]
    %v235 = vld [vmem:[#allocation7 + $0x378] sm:$0xff]
    %v236 = vld [vmem:[#allocation7 + $0x380] sm:$0xff]
    %v237 = vld [vmem:[#allocation7 + $0x388] sm:$0xff]
    %v238 = vld [vmem:[#allocation7 + $0x390] sm:$0xff]
    %v239 = vld [vmem:[#allocation7 + $0x398] sm:$0xff]
    %v240 = vld [vmem:[#allocation7 + $0x3a0] sm:$0xff]
    %v241 = vld [vmem:[#allocation7 + $0x3a8] sm:$0xff]
    %v242 = vld [vmem:[#allocation7 + $0x3b0] sm:$0xff]
    %v243 = vld [vmem:[#allocation7 + $0x3b8] sm:$0xff]
    %v244 = vld [vmem:[#allocation7 + $0x3c0] sm:$0xff]
    %v245 = vld [vmem:[#allocation7 + $0x3c8] sm:$0xff]
    %v246 = vld [vmem:[#allocation7 + $0x3d0] sm:$0xff]
    %v247 = vld [vmem:[#allocation7 + $0x3d8] sm:$0xff]
    %v248 = vld [vmem:[#allocation7 + $0x3e0] sm:$0xff]
    %v249 = vld [vmem:[#allocation7 + $0x3e8] sm:$0xff]
    %v250 = vld [vmem:[#allocation7 + $0x3f0] sm:$0xff]
    %v251 = vld [vmem:[#allocation7 + $0x3f8] sm:$0xff]
    %v252 = vld [vmem:[#allocation8] sm:$0xff]
    %v253 = vld [vmem:[#allocation8 + $0x8] sm:$0xff]
    %v254 = vld [vmem:[#allocation8 + $0x10] sm:$0xff]
    %v255 = vld [vmem:[#allocation8 + $0x18] sm:$0xff]
    %v256 = vld [vmem:[#allocation8 + $0x20] sm:$0xff]
    %v257 = vld [vmem:[#allocation8 + $0x28] sm:$0xff]
    %v258 = vld [vmem:[#allocation8 + $0x30] sm:$0xff]
    %v259 = vld [vmem:[#allocation8 + $0x38] sm:$0xff]
    %v260 = vld [vmem:[#allocation8 + $0x40] sm:$0xff]
    %v261 = vld [vmem:[#allocation8 + $0x48] sm:$0xff]
    %v262 = vld [vmem:[#allocation8 + $0x50] sm:$0xff]
    %v263 = vld [vmem:[#allocation8 + $0x58] sm:$0xff]
    %v264 = vld [vmem:[#allocation8 + $0x60] sm:$0xff]
    %v265 = vld [vmem:[#allocation8 + $0x68] sm:$0xff]
    %v266 = vld [vmem:[#allocation8 + $0x70] sm:$0xff]
    %v267 = vld [vmem:[#allocation8 + $0x78] sm:$0xff]
    %v268 = vld [vmem:[#allocation8 + $0x80] sm:$0xff]
    %v269 = vld [vmem:[#allocation8 + $0x88] sm:$0xff]
    %v270 = vld [vmem:[#allocation8 + $0x90] sm:$0xff]
    %v271 = vld [vmem:[#allocation8 + $0x98] sm:$0xff]
    %v272 = vld [vmem:[#allocation8 + $0xa0] sm:$0xff]
    %v273 = vld [vmem:[#allocation8 + $0xa8] sm:$0xff]
    %v274 = vld [vmem:[#allocation8 + $0xb0] sm:$0xff]
    %v275 = vld [vmem:[#allocation8 + $0xb8] sm:$0xff]
    %v276 = vld [vmem:[#allocation8 + $0xc0] sm:$0xff]
    %v277 = vld [vmem:[#allocation8 + $0xc8] sm:$0xff]
    %v278 = vld [vmem:[#allocation8 + $0xd0] sm:$0xff]
    %v279 = vld [vmem:[#allocation8 + $0xd8] sm:$0xff]
    %v280 = vld [vmem:[#allocation8 + $0xe0] sm:$0xff]
    %v281 = vld [vmem:[#allocation8 + $0xe8] sm:$0xff]
    %v282 = vld [vmem:[#allocation8 + $0xf0] sm:$0xff]
    %v283 = vld [vmem:[#allocation8 + $0xf8] sm:$0xff]
    %v284 = vld [vmem:[#allocation8 + $0x100] sm:$0xff]
    %v285 = vld [vmem:[#allocation8 + $0x108] sm:$0xff]
    %v286 = vld [vmem:[#allocation8 + $0x110] sm:$0xff]
    %v287 = vld [vmem:[#allocation8 + $0x118] sm:$0xff]
    %v288 = vld [vmem:[#allocation8 + $0x120] sm:$0xff]
    %v289 = vld [vmem:[#allocation8 + $0x128] sm:$0xff]
    %v290 = vld [vmem:[#allocation8 + $0x130] sm:$0xff]
    %v291 = vld [vmem:[#allocation8 + $0x138] sm:$0xff]
    %v292 = vld [vmem:[#allocation8 + $0x140] sm:$0xff]
    %v293 = vld [vmem:[#allocation8 + $0x148] sm:$0xff]
    %v294 = vld [vmem:[#allocation8 + $0x150] sm:$0xff]
    %v295 = vld [vmem:[#allocation8 + $0x158] sm:$0xff]
    %v296 = vld [vmem:[#allocation8 + $0x160] sm:$0xff]
    %v297 = vld [vmem:[#allocation8 + $0x168] sm:$0xff]
    %v298 = vld [vmem:[#allocation8 + $0x170] sm:$0xff]
    %v299 = vld [vmem:[#allocation8 + $0x178] sm:$0xff]
    %v300 = vld [vmem:[#allocation8 + $0x180] sm:$0xff]
    %v301 = vld [vmem:[#allocation8 + $0x188] sm:$0xff]
    %v302 = vld [vmem:[#allocation8 + $0x190] sm:$0xff]
    %v303 = vld [vmem:[#allocation8 + $0x198] sm:$0xff]
    %v304 = vld [vmem:[#allocation8 + $0x1a0] sm:$0xff]
    %v305 = vld [vmem:[#allocation8 + $0x1a8] sm:$0xff]
    %v306 = vld [vmem:[#allocation8 + $0x1b0] sm:$0xff]
    %v307 = vld [vmem:[#allocation8 + $0x1b8] sm:$0xff]
    %v308 = vld [vmem:[#allocation8 + $0x1c0] sm:$0xff]
    %v309 = vld [vmem:[#allocation8 + $0x1c8] sm:$0xff]
    %v310 = vld [vmem:[#allocation8 + $0x1d0] sm:$0xff]
    %v311 = vld [vmem:[#allocation8 + $0x1d8] sm:$0xff]
    %v312 = vld [vmem:[#allocation8 + $0x1e0] sm:$0xff]
    %v313 = vld [vmem:[#allocation8 + $0x1e8] sm:$0xff]
    %v314 = vld [vmem:[#allocation8 + $0x1f0] sm:$0xff]
    %v315 = vld [vmem:[#allocation8 + $0x1f8] sm:$0xff]
    %v316 = vld [vmem:[#allocation8 + $0x200] sm:$0xff]
    %v317 = vld [vmem:[#allocation8 + $0x208] sm:$0xff]
    %v318 = vld [vmem:[#allocation8 + $0x210] sm:$0xff]
    %v319 = vld [vmem:[#allocation8 + $0x218] sm:$0xff]
    %v320 = vld [vmem:[#allocation8 + $0x220] sm:$0xff]
    %v321 = vld [vmem:[#allocation8 + $0x228] sm:$0xff]
    %v322 = vld [vmem:[#allocation8 + $0x230] sm:$0xff]
    %v323 = vld [vmem:[#allocation8 + $0x238] sm:$0xff]
    %v324 = vld [vmem:[#allocation8 + $0x240] sm:$0xff]
    %v325 = vld [vmem:[#allocation8 + $0x248] sm:$0xff]
    %v326 = vld [vmem:[#allocation8 + $0x250] sm:$0xff]
    %v327 = vld [vmem:[#allocation8 + $0x258] sm:$0xff]
    %v328 = vld [vmem:[#allocation8 + $0x260] sm:$0xff]
    %v329 = vld [vmem:[#allocation8 + $0x268] sm:$0xff]
    %v330 = vld [vmem:[#allocation8 + $0x270] sm:$0xff]
    %v331 = vld [vmem:[#allocation8 + $0x278] sm:$0xff]
    %v332 = vld [vmem:[#allocation8 + $0x280] sm:$0xff]
    %v333 = vld [vmem:[#allocation8 + $0x288] sm:$0xff]
    %v334 = vld [vmem:[#allocation8 + $0x290] sm:$0xff]
    %v335 = vld [vmem:[#allocation8 + $0x298] sm:$0xff]
    %v336 = vld [vmem:[#allocation8 + $0x2a0] sm:$0xff]
    %v337 = vld [vmem:[#allocation8 + $0x2a8] sm:$0xff]
    %v338 = vld [vmem:[#allocation8 + $0x2b0] sm:$0xff]
    %v339 = vld [vmem:[#allocation8 + $0x2b8] sm:$0xff]
    %v340 = vld [vmem:[#allocation8 + $0x2c0] sm:$0xff]
    %v341 = vld [vmem:[#allocation8 + $0x2c8] sm:$0xff]
    %v342 = vld [vmem:[#allocation8 + $0x2d0] sm:$0xff]
    %v343 = vld [vmem:[#allocation8 + $0x2d8] sm:$0xff]
    %v344 = vld [vmem:[#allocation8 + $0x2e0] sm:$0xff]
    %v345 = vld [vmem:[#allocation8 + $0x2e8] sm:$0xff]
    %v346 = vld [vmem:[#allocation8 + $0x2f0] sm:$0xff]
    %v347 = vld [vmem:[#allocation8 + $0x2f8] sm:$0xff]
    %v348 = vld [vmem:[#allocation8 + $0x300] sm:$0xff]
    %v349 = vld [vmem:[#allocation8 + $0x308] sm:$0xff]
    %v350 = vld [vmem:[#allocation8 + $0x310] sm:$0xff]
    %v351 = vld [vmem:[#allocation8 + $0x318] sm:$0xff]
    %v352 = vld [vmem:[#allocation8 + $0x320] sm:$0xff]
    %v353 = vld [vmem:[#allocation8 + $0x328] sm:$0xff]
    %v354 = vld [vmem:[#allocation8 + $0x330] sm:$0xff]
    %v355 = vld [vmem:[#allocation8 + $0x338] sm:$0xff]
    %v356 = vld [vmem:[#allocation8 + $0x340] sm:$0xff]
    %v357 = vld [vmem:[#allocation8 + $0x348] sm:$0xff]
    %v358 = vld [vmem:[#allocation8 + $0x350] sm:$0xff]
    %v359 = vld [vmem:[#allocation8 + $0x358] sm:$0xff]
    %v360 = vld [vmem:[#allocation8 + $0x360] sm:$0xff]
    %v361 = vld [vmem:[#allocation8 + $0x368] sm:$0xff]
    %v362 = vld [vmem:[#allocation8 + $0x370] sm:$0xff]
    %v363 = vld [vmem:[#allocation8 + $0x378] sm:$0xff]
    %v364 = vld [vmem:[#allocation8 + $0x380] sm:$0xff]
    %v365 = vld [vmem:[#allocation8 + $0x388] sm:$0xff]
    %v366 = vld [vmem:[#allocation8 + $0x390] sm:$0xff]
    %v367 = vld [vmem:[#allocation8 + $0x398] sm:$0xff]
    %v368 = vld [vmem:[#allocation8 + $0x3a0] sm:$0xff]
    %v369 = vld [vmem:[#allocation8 + $0x3a8] sm:$0xff]
    %v370 = vld [vmem:[#allocation8 + $0x3b0] sm:$0xff]
    %v371 = vld [vmem:[#allocation8 + $0x3b8] sm:$0xff]
    %v372 = vld [vmem:[#allocation8 + $0x3c0] sm:$0xff]
    %v373 = vld [vmem:[#allocation8 + $0x3c8] sm:$0xff]
    %v374 = vld [vmem:[#allocation8 + $0x3d0] sm:$0xff]
    %v375 = vld [vmem:[#allocation8 + $0x3d8] sm:$0xff]
    %v376 = vld [vmem:[#allocation8 + $0x3e0] sm:$0xff]
    %v377 = vld [vmem:[#allocation8 + $0x3e8] sm:$0xff]
    %v378 = vld [vmem:[#allocation8 + $0x3f0] sm:$0xff]
    %v379 = vld [vmem:[#allocation8 + $0x3f8] sm:$0xff]
    %v384 = vunpack.c.l.b16 %v120
    %v385 = vunpack.c.h.b16 %v120
    %v386 = vunpack.c.l.b16 %v121
    %v387 = vunpack.c.h.b16 %v121
    %v388 = vunpack.c.l.b16 %v122
    %v389 = vunpack.c.h.b16 %v122
    %v390 = vunpack.c.l.b16 %v123
    %v391 = vunpack.c.h.b16 %v123
    %v392 = vpack.c.b16 %v388, %v384
    %v393 = vpack.c.b16 %v389, %v385
    %v394 = vpack.c.b16 %v390, %v386
    %v395 = vpack.c.b16 %v391, %v387
    %v528 = vunpack.c.l.b16 %v252
    %v529 = vunpack.c.h.b16 %v252
    %v530 = vunpack.c.l.b16 %v253
    %v531 = vunpack.c.h.b16 %v253
    %v532 = vunpack.c.l.b16 %v254
    %v533 = vunpack.c.h.b16 %v254
    %v534 = vunpack.c.l.b16 %v255
    %v535 = vunpack.c.h.b16 %v255
    %v536 = vunpack.c.l.b16 %v256
    %v537 = vunpack.c.h.b16 %v256
    %v538 = vunpack.c.l.b16 %v257
    %v539 = vunpack.c.h.b16 %v257
    %v540 = vunpack.c.l.b16 %v258
    %v541 = vunpack.c.h.b16 %v258
    %v542 = vunpack.c.l.b16 %v259
    %v543 = vunpack.c.h.b16 %v259
    %v544 = vunpack.c.l.b16 %v260
    %v545 = vunpack.c.h.b16 %v260
    %v546 = vunpack.c.l.b16 %v261
    %v547 = vunpack.c.h.b16 %v261
    %v548 = vunpack.c.l.b16 %v262
    %v549 = vunpack.c.h.b16 %v262
    %v550 = vunpack.c.l.b16 %v263
    %v551 = vunpack.c.h.b16 %v263
    %v552 = vunpack.c.l.b16 %v264
    %v553 = vunpack.c.h.b16 %v264
    %v554 = vunpack.c.l.b16 %v265
    %v555 = vunpack.c.h.b16 %v265
    %v556 = vunpack.c.l.b16 %v266
    %v557 = vunpack.c.h.b16 %v266
    %v558 = vunpack.c.l.b16 %v267
    %v559 = vunpack.c.h.b16 %v267
    %v560 = vunpack.c.l.b16 %v268
    %v561 = vunpack.c.h.b16 %v268
    %v562 = vunpack.c.l.b16 %v269
    %v563 = vunpack.c.h.b16 %v269
    %v564 = vunpack.c.l.b16 %v270
    %v565 = vunpack.c.h.b16 %v270
    %v566 = vunpack.c.l.b16 %v271
    %v567 = vunpack.c.h.b16 %v271
    %v568 = vunpack.c.l.b16 %v272
    %v569 = vunpack.c.h.b16 %v272
    %v570 = vunpack.c.l.b16 %v273
    %v571 = vunpack.c.h.b16 %v273
    %v572 = vunpack.c.l.b16 %v274
    %v573 = vunpack.c.h.b16 %v274
    %v574 = vunpack.c.l.b16 %v275
    %v575 = vunpack.c.h.b16 %v275
    %v576 = vunpack.c.l.b16 %v276
    %v577 = vunpack.c.h.b16 %v276
    %v578 = vunpack.c.l.b16 %v277
    %v579 = vunpack.c.h.b16 %v277
    %v580 = vunpack.c.l.b16 %v278
    %v581 = vunpack.c.h.b16 %v278
    %v582 = vunpack.c.l.b16 %v279
    %v583 = vunpack.c.h.b16 %v279
    %v584 = vunpack.c.l.b16 %v280
    %v585 = vunpack.c.h.b16 %v280
    %v586 = vunpack.c.l.b16 %v281
    %v587 = vunpack.c.h.b16 %v281
    %v588 = vunpack.c.l.b16 %v282
    %v589 = vunpack.c.h.b16 %v282
    %v590 = vunpack.c.l.b16 %v283
    %v591 = vunpack.c.h.b16 %v283
    %v592 = vunpack.c.l.b16 %v284
    %v593 = vunpack.c.h.b16 %v284
    %v594 = vunpack.c.l.b16 %v285
    %v595 = vunpack.c.h.b16 %v285
    %v596 = vunpack.c.l.b16 %v286
    %v597 = vunpack.c.h.b16 %v286
    %v598 = vunpack.c.l.b16 %v287
    %v599 = vunpack.c.h.b16 %v287
    %v600 = vunpack.c.l.b16 %v288
    %v601 = vunpack.c.h.b16 %v288
    %v602 = vunpack.c.l.b16 %v289
    %v603 = vunpack.c.h.b16 %v289
    %v604 = vunpack.c.l.b16 %v290
    %v605 = vunpack.c.h.b16 %v290
    %v606 = vunpack.c.l.b16 %v291
    %v607 = vunpack.c.h.b16 %v291
    %v608 = vunpack.c.l.b16 %v292
    %v609 = vunpack.c.h.b16 %v292
    %v610 = vunpack.c.l.b16 %v293
    %v611 = vunpack.c.h.b16 %v293
    %v612 = vunpack.c.l.b16 %v294
    %v613 = vunpack.c.h.b16 %v294
    %v614 = vunpack.c.l.b16 %v295
    %v615 = vunpack.c.h.b16 %v295
    %v616 = vunpack.c.l.b16 %v296
    %v617 = vunpack.c.h.b16 %v296
    %v618 = vunpack.c.l.b16 %v297
    %v619 = vunpack.c.h.b16 %v297
    %v620 = vunpack.c.l.b16 %v298
    %v621 = vunpack.c.h.b16 %v298
    %v622 = vunpack.c.l.b16 %v299
    %v623 = vunpack.c.h.b16 %v299
    %v624 = vunpack.c.l.b16 %v300
    %v625 = vunpack.c.h.b16 %v300
    %v626 = vunpack.c.l.b16 %v301
    %v627 = vunpack.c.h.b16 %v301
    %v628 = vunpack.c.l.b16 %v302
    %v629 = vunpack.c.h.b16 %v302
    %v630 = vunpack.c.l.b16 %v303
    %v631 = vunpack.c.h.b16 %v303
    %v632 = vunpack.c.l.b16 %v304
    %v633 = vunpack.c.h.b16 %v304
    %v634 = vunpack.c.l.b16 %v305
    %v635 = vunpack.c.h.b16 %v305
    %v636 = vunpack.c.l.b16 %v306
    %v637 = vunpack.c.h.b16 %v306
    %v638 = vunpack.c.l.b16 %v307
    %v639 = vunpack.c.h.b16 %v307
    %v640 = vunpack.c.l.b16 %v308
    %v641 = vunpack.c.h.b16 %v308
    %v642 = vunpack.c.l.b16 %v309
    %v643 = vunpack.c.h.b16 %v309
    %v644 = vunpack.c.l.b16 %v310
    %v645 = vunpack.c.h.b16 %v310
    %v646 = vunpack.c.l.b16 %v311
    %v647 = vunpack.c.h.b16 %v311
    %v648 = vunpack.c.l.b16 %v312
    %v649 = vunpack.c.h.b16 %v312
    %v650 = vunpack.c.l.b16 %v313
    %v651 = vunpack.c.h.b16 %v313
    %v652 = vunpack.c.l.b16 %v314
    %v653 = vunpack.c.h.b16 %v314
    %v654 = vunpack.c.l.b16 %v315
    %v655 = vunpack.c.h.b16 %v315
    %v656 = vunpack.c.l.b16 %v316
    %v657 = vunpack.c.h.b16 %v316
    %v658 = vunpack.c.l.b16 %v317
    %v659 = vunpack.c.h.b16 %v317
    %v660 = vunpack.c.l.b16 %v318
    %v661 = vunpack.c.h.b16 %v318
    %v662 = vunpack.c.l.b16 %v319
    %v663 = vunpack.c.h.b16 %v319
    %v664 = vunpack.c.l.b16 %v320
    %v665 = vunpack.c.h.b16 %v320
    %v666 = vunpack.c.l.b16 %v321
    %v667 = vunpack.c.h.b16 %v321
    %v668 = vunpack.c.l.b16 %v322
    %v669 = vunpack.c.h.b16 %v322
    %v670 = vunpack.c.l.b16 %v323
    %v671 = vunpack.c.h.b16 %v323
    %v672 = vunpack.c.l.b16 %v324
    %v673 = vunpack.c.h.b16 %v324
    %v674 = vunpack.c.l.b16 %v325
    %v675 = vunpack.c.h.b16 %v325
    %v676 = vunpack.c.l.b16 %v326
    %v677 = vunpack.c.h.b16 %v326
    %v678 = vunpack.c.l.b16 %v327
    %v679 = vunpack.c.h.b16 %v327
    %v680 = vunpack.c.l.b16 %v328
    %v681 = vunpack.c.h.b16 %v328
    %v682 = vunpack.c.l.b16 %v329
    %v683 = vunpack.c.h.b16 %v329
    %v684 = vunpack.c.l.b16 %v330
    %v685 = vunpack.c.h.b16 %v330
    %v686 = vunpack.c.l.b16 %v331
    %v687 = vunpack.c.h.b16 %v331
    %v688 = vunpack.c.l.b16 %v332
    %v689 = vunpack.c.h.b16 %v332
    %v690 = vunpack.c.l.b16 %v333
    %v691 = vunpack.c.h.b16 %v333
    %v692 = vunpack.c.l.b16 %v334
    %v693 = vunpack.c.h.b16 %v334
    %v694 = vunpack.c.l.b16 %v335
    %v695 = vunpack.c.h.b16 %v335
    %v696 = vunpack.c.l.b16 %v336
    %v697 = vunpack.c.h.b16 %v336
    %v698 = vunpack.c.l.b16 %v337
    %v699 = vunpack.c.h.b16 %v337
    %v700 = vunpack.c.l.b16 %v338
    %v701 = vunpack.c.h.b16 %v338
    %v702 = vunpack.c.l.b16 %v339
    %v703 = vunpack.c.h.b16 %v339
    %v704 = vunpack.c.l.b16 %v340
    %v705 = vunpack.c.h.b16 %v340
    %v706 = vunpack.c.l.b16 %v341
    %v707 = vunpack.c.h.b16 %v341
    %v708 = vunpack.c.l.b16 %v342
    %v709 = vunpack.c.h.b16 %v342
    %v710 = vunpack.c.l.b16 %v343
    %v711 = vunpack.c.h.b16 %v343
    %v712 = vunpack.c.l.b16 %v344
    %v713 = vunpack.c.h.b16 %v344
    %v714 = vunpack.c.l.b16 %v345
    %v715 = vunpack.c.h.b16 %v345
    %v716 = vunpack.c.l.b16 %v346
    %v717 = vunpack.c.h.b16 %v346
    %v718 = vunpack.c.l.b16 %v347
    %v719 = vunpack.c.h.b16 %v347
    %v720 = vunpack.c.l.b16 %v348
    %v721 = vunpack.c.h.b16 %v348
    %v722 = vunpack.c.l.b16 %v349
    %v723 = vunpack.c.h.b16 %v349
    %v724 = vunpack.c.l.b16 %v350
    %v725 = vunpack.c.h.b16 %v350
    %v726 = vunpack.c.l.b16 %v351
    %v727 = vunpack.c.h.b16 %v351
    %v728 = vunpack.c.l.b16 %v352
    %v729 = vunpack.c.h.b16 %v352
    %v730 = vunpack.c.l.b16 %v353
    %v731 = vunpack.c.h.b16 %v353
    %v732 = vunpack.c.l.b16 %v354
    %v733 = vunpack.c.h.b16 %v354
    %v734 = vunpack.c.l.b16 %v355
    %v735 = vunpack.c.h.b16 %v355
    %v736 = vunpack.c.l.b16 %v356
    %v737 = vunpack.c.h.b16 %v356
    %v738 = vunpack.c.l.b16 %v357
    %v739 = vunpack.c.h.b16 %v357
    %v740 = vunpack.c.l.b16 %v358
    %v741 = vunpack.c.h.b16 %v358
    %v742 = vunpack.c.l.b16 %v359
    %v743 = vunpack.c.h.b16 %v359
    %v744 = vunpack.c.l.b16 %v360
    %v745 = vunpack.c.h.b16 %v360
    %v746 = vunpack.c.l.b16 %v361
    %v747 = vunpack.c.h.b16 %v361
    %v748 = vunpack.c.l.b16 %v362
    %v749 = vunpack.c.h.b16 %v362
    %v750 = vunpack.c.l.b16 %v363
    %v751 = vunpack.c.h.b16 %v363
    %v752 = vunpack.c.l.b16 %v364
    %v753 = vunpack.c.h.b16 %v364
    %v754 = vunpack.c.l.b16 %v365
    %v755 = vunpack.c.h.b16 %v365
    %v756 = vunpack.c.l.b16 %v366
    %v757 = vunpack.c.h.b16 %v366
    %v758 = vunpack.c.l.b16 %v367
    %v759 = vunpack.c.h.b16 %v367
    %v760 = vunpack.c.l.b16 %v368
    %v761 = vunpack.c.h.b16 %v368
    %v762 = vunpack.c.l.b16 %v369
    %v763 = vunpack.c.h.b16 %v369
    %v764 = vunpack.c.l.b16 %v370
    %v765 = vunpack.c.h.b16 %v370
    %v766 = vunpack.c.l.b16 %v371
    %v767 = vunpack.c.h.b16 %v371
    %v768 = vunpack.c.l.b16 %v372
    %v769 = vunpack.c.h.b16 %v372
    %v770 = vunpack.c.l.b16 %v373
    %v771 = vunpack.c.h.b16 %v373
    %v772 = vunpack.c.l.b16 %v374
    %v773 = vunpack.c.h.b16 %v374
    %v774 = vunpack.c.l.b16 %v375
    %v775 = vunpack.c.h.b16 %v375
    %v776 = vunpack.c.l.b16 %v376
    %v777 = vunpack.c.h.b16 %v376
    %v778 = vunpack.c.l.b16 %v377
    %v779 = vunpack.c.h.b16 %v377
    %v780 = vunpack.c.l.b16 %v378
    %v781 = vunpack.c.h.b16 %v378
    %v782 = vunpack.c.l.b16 %v379
    %v783 = vunpack.c.h.b16 %v379
    %v784 = vpack.c.b16 %v532, %v528
    %v785 = vpack.c.b16 %v533, %v529
    %v786 = vpack.c.b16 %v534, %v530
    %v787 = vpack.c.b16 %v535, %v531
    %v788 = vpack.c.b16 %v540, %v536
    %v789 = vpack.c.b16 %v541, %v537
    %v790 = vpack.c.b16 %v542, %v538
    %v791 = vpack.c.b16 %v543, %v539
    %v792 = vpack.c.b16 %v548, %v544
    %v793 = vpack.c.b16 %v549, %v545
    %v794 = vpack.c.b16 %v550, %v546
    %v795 = vpack.c.b16 %v551, %v547
    %v796 = vpack.c.b16 %v556, %v552
    %v797 = vpack.c.b16 %v557, %v553
    %v798 = vpack.c.b16 %v558, %v554
    %v799 = vpack.c.b16 %v559, %v555
    %v800 = vpack.c.b16 %v564, %v560
    %v801 = vpack.c.b16 %v565, %v561
    %v802 = vpack.c.b16 %v566, %v562
    %v803 = vpack.c.b16 %v567, %v563
    %v804 = vpack.c.b16 %v572, %v568
    %v805 = vpack.c.b16 %v573, %v569
    %v806 = vpack.c.b16 %v574, %v570
    %v807 = vpack.c.b16 %v575, %v571
    %v808 = vpack.c.b16 %v580, %v576
    %v809 = vpack.c.b16 %v581, %v577
    %v810 = vpack.c.b16 %v582, %v578
    %v811 = vpack.c.b16 %v583, %v579
    %v812 = vpack.c.b16 %v588, %v584
    %v813 = vpack.c.b16 %v589, %v585
    %v814 = vpack.c.b16 %v590, %v586
    %v815 = vpack.c.b16 %v591, %v587
    %v816 = vpack.c.b16 %v596, %v592
    %v817 = vpack.c.b16 %v597, %v593
    %v818 = vpack.c.b16 %v598, %v594
    %v819 = vpack.c.b16 %v599, %v595
    %v820 = vpack.c.b16 %v604, %v600
    %v821 = vpack.c.b16 %v605, %v601
    %v822 = vpack.c.b16 %v606, %v602
    %v823 = vpack.c.b16 %v607, %v603
    %v824 = vpack.c.b16 %v612, %v608
    %v825 = vpack.c.b16 %v613, %v609
    %v826 = vpack.c.b16 %v614, %v610
    %v827 = vpack.c.b16 %v615, %v611
    %v828 = vpack.c.b16 %v620, %v616
    %v829 = vpack.c.b16 %v621, %v617
    %v830 = vpack.c.b16 %v622, %v618
    %v831 = vpack.c.b16 %v623, %v619
    %v832 = vpack.c.b16 %v628, %v624
    %v833 = vpack.c.b16 %v629, %v625
    %v834 = vpack.c.b16 %v630, %v626
    %v835 = vpack.c.b16 %v631, %v627
    %v836 = vpack.c.b16 %v636, %v632
    %v837 = vpack.c.b16 %v637, %v633
    %v838 = vpack.c.b16 %v638, %v634
    %v839 = vpack.c.b16 %v639, %v635
    %v840 = vpack.c.b16 %v644, %v640
    %v841 = vpack.c.b16 %v645, %v641
    %v842 = vpack.c.b16 %v646, %v642
    %v843 = vpack.c.b16 %v647, %v643
    %v844 = vpack.c.b16 %v652, %v648
    %v845 = vpack.c.b16 %v653, %v649
    %v846 = vpack.c.b16 %v654, %v650
    %v847 = vpack.c.b16 %v655, %v651
    %v848 = vpack.c.b16 %v660, %v656
    %v849 = vpack.c.b16 %v661, %v657
    %v850 = vpack.c.b16 %v662, %v658
    %v851 = vpack.c.b16 %v663, %v659
    %v852 = vpack.c.b16 %v668, %v664
    %v853 = vpack.c.b16 %v669, %v665
    %v854 = vpack.c.b16 %v670, %v666
    %v855 = vpack.c.b16 %v671, %v667
    %v856 = vpack.c.b16 %v676, %v672
    %v857 = vpack.c.b16 %v677, %v673
    %v858 = vpack.c.b16 %v678, %v674
    %v859 = vpack.c.b16 %v679, %v675
    %v860 = vpack.c.b16 %v684, %v680
    %v861 = vpack.c.b16 %v685, %v681
    %v862 = vpack.c.b16 %v686, %v682
    %v863 = vpack.c.b16 %v687, %v683
    %v864 = vpack.c.b16 %v692, %v688
    %v865 = vpack.c.b16 %v693, %v689
    %v866 = vpack.c.b16 %v694, %v690
    %v867 = vpack.c.b16 %v695, %v691
    %v868 = vpack.c.b16 %v700, %v696
    %v869 = vpack.c.b16 %v701, %v697
    %v870 = vpack.c.b16 %v702, %v698
    %v871 = vpack.c.b16 %v703, %v699
    %v872 = vpack.c.b16 %v708, %v704
    %v873 = vpack.c.b16 %v709, %v705
    %v874 = vpack.c.b16 %v710, %v706
    %v875 = vpack.c.b16 %v711, %v707
    %v876 = vpack.c.b16 %v716, %v712
    %v877 = vpack.c.b16 %v717, %v713
    %v878 = vpack.c.b16 %v718, %v714
    %v879 = vpack.c.b16 %v719, %v715
    %v880 = vpack.c.b16 %v724, %v720
    %v881 = vpack.c.b16 %v725, %v721
    %v882 = vpack.c.b16 %v726, %v722
    %v883 = vpack.c.b16 %v727, %v723
    %v884 = vpack.c.b16 %v732, %v728
    %v885 = vpack.c.b16 %v733, %v729
    %v886 = vpack.c.b16 %v734, %v730
    %v887 = vpack.c.b16 %v735, %v731
    %v888 = vpack.c.b16 %v740, %v736
    %v889 = vpack.c.b16 %v741, %v737
    %v890 = vpack.c.b16 %v742, %v738
    %v891 = vpack.c.b16 %v743, %v739
    %v892 = vpack.c.b16 %v748, %v744
    %v893 = vpack.c.b16 %v749, %v745
    %v894 = vpack.c.b16 %v750, %v746
    %v895 = vpack.c.b16 %v751, %v747
    %v896 = vpack.c.b16 %v756, %v752
    %v897 = vpack.c.b16 %v757, %v753
    %v898 = vpack.c.b16 %v758, %v754
    %v899 = vpack.c.b16 %v759, %v755
    %v900 = vpack.c.b16 %v764, %v760
    %v901 = vpack.c.b16 %v765, %v761
    %v902 = vpack.c.b16 %v766, %v762
    %v903 = vpack.c.b16 %v767, %v763
    %v904 = vpack.c.b16 %v772, %v768
    %v905 = vpack.c.b16 %v773, %v769
    %v906 = vpack.c.b16 %v774, %v770
    %v907 = vpack.c.b16 %v775, %v771
    %v908 = vpack.c.b16 %v780, %v776
    %v909 = vpack.c.b16 %v781, %v777
    %v910 = vpack.c.b16 %v782, %v778
    %v911 = vpack.c.b16 %v783, %v779
    %1040 = vmatprep.subr.bf16.mxu0 %v813
    %1041 = vmatpush1.bf16.msra.mxu0 %v812
    %1042 = vmatprep.subr.bf16.mxu0 %v809
    %1043 = vmatpush1.bf16.msra.mxu0 %v808
    %1044 = vmatprep.subr.bf16.mxu0 %v805
    %1045 = vmatpush1.bf16.msra.mxu0 %v804
    %1046 = vmatprep.subr.bf16.mxu0 %v801
    %1047 = vmatpush1.bf16.msra.mxu0 %v800
    %1048 = vmatprep.subr.bf16.mxu0 %v797
    %1049 = vmatpush1.bf16.msra.mxu0 %v796
    %1050 = vmatprep.subr.bf16.mxu0 %v793
    %1051 = vmatpush1.bf16.msra.mxu0 %v792
    %1052 = vmatprep.subr.bf16.mxu0 %v789
    %1053 = vmatpush1.bf16.msra.mxu0 %v788
    %1054 = vmatprep.subr.bf16.mxu0 %v785
    %1055 = vmatpush1.bf16.msra.mxu0 %v784
    %1056 = vmatprep.subr.bf16.mxu0 %v845
    %1057 = vmatpush2.bf16.msra.mxu0 %v844
    %1058 = vmatprep.subr.bf16.mxu0 %v841
    %1059 = vmatpush2.bf16.msra.mxu0 %v840
    %1060 = vmatprep.subr.bf16.mxu0 %v837
    %1061 = vmatpush2.bf16.msra.mxu0 %v836
    %1062 = vmatprep.subr.bf16.mxu0 %v833
    %1063 = vmatpush2.bf16.msra.mxu0 %v832
    %1064 = vmatprep.subr.bf16.mxu0 %v829
    %1065 = vmatpush2.bf16.msra.mxu0 %v828
    %1066 = vmatprep.subr.bf16.mxu0 %v825
    %1067 = vmatpush2.bf16.msra.mxu0 %v824
    %1068 = vmatprep.subr.bf16.mxu0 %v821
    %1069 = vmatpush2.bf16.msra.mxu0 %v820
    %1070 = vmatprep.subr.bf16.mxu0 %v817
    %1071 = vmatpush2.bf16.msra.mxu0 %v816
    %1072 = vmatprep.mubr.bf16.mxu0 %v393
    %1073 = vmatmul.mubr.bf16.gmra.mxu0 %v392
    %v1074 = vpop.f32.mrf.mxu0
    %v1075 = vadd.f32 0.0, %v1074
    %v1076 = vpop.f32.mrf.mxu0
    %v1077 = vadd.f32 0.0, %v1076
    %v1078 = vpop.f32.mrf.mxu0
    %v1079 = vadd.f32 0.0, %v1078
    %v1080 = vpop.f32.mrf.mxu0
    %v1081 = vadd.f32 0.0, %v1080
    %1082 = vdwg.mxu0
    %1083 = vmatprep.subr.bf16.mxu0 %v877
    %1084 = vmatpush1.bf16.msra.mxu0 %v876
    %1085 = vmatprep.subr.bf16.mxu0 %v873
    %1086 = vmatpush1.bf16.msra.mxu0 %v872
    %1087 = vmatprep.subr.bf16.mxu0 %v869
    %1088 = vmatpush1.bf16.msra.mxu0 %v868
    %1089 = vmatprep.subr.bf16.mxu0 %v865
    %1090 = vmatpush1.bf16.msra.mxu0 %v864
    %1091 = vmatprep.subr.bf16.mxu0 %v861
    %1092 = vmatpush1.bf16.msra.mxu0 %v860
    %1093 = vmatprep.subr.bf16.mxu0 %v857
    %1094 = vmatpush1.bf16.msra.mxu0 %v856
    %1095 = vmatprep.subr.bf16.mxu0 %v853
    %1096 = vmatpush1.bf16.msra.mxu0 %v852
    %1097 = vmatprep.subr.bf16.mxu0 %v849
    %1098 = vmatpush1.bf16.msra.mxu0 %v848
    %1099 = vmatprep.subr.bf16.mxu0 %v909
    %1100 = vmatpush2.bf16.msra.mxu0 %v908
    %1101 = vmatprep.subr.bf16.mxu0 %v905
    %1102 = vmatpush2.bf16.msra.mxu0 %v904
    %1103 = vmatprep.subr.bf16.mxu0 %v901
    %1104 = vmatpush2.bf16.msra.mxu0 %v900
    %1105 = vmatprep.subr.bf16.mxu0 %v897
    %1106 = vmatpush2.bf16.msra.mxu0 %v896
    %1107 = vmatprep.subr.bf16.mxu0 %v893
    %1108 = vmatpush2.bf16.msra.mxu0 %v892
    %1109 = vmatprep.subr.bf16.mxu0 %v889
    %1110 = vmatpush2.bf16.msra.mxu0 %v888
    %1111 = vmatprep.subr.bf16.mxu0 %v885
    %1112 = vmatpush2.bf16.msra.mxu0 %v884
    %1113 = vmatprep.subr.bf16.mxu0 %v881
    %1114 = vmatpush2.bf16.msra.mxu0 %v880
    %1115 = vmatprep.mubr.bf16.mxu0 %v395
    %1116 = vmatmul.mubr.bf16.gmra.mxu0 %v394
    %v1117 = vpop.f32.mrf.mxu0
    %v1118 = vadd.f32 %v1075, %v1117
    %v1119 = vpop.f32.mrf.mxu0
    %v1120 = vadd.f32 %v1077, %v1119
    %v1121 = vpop.f32.mrf.mxu0
    %v1122 = vadd.f32 %v1079, %v1121
    %v1123 = vpop.f32.mrf.mxu0
    %v1124 = vadd.f32 %v1081, %v1123
    %1125 = vdwg.mxu0
    %1126 = vmatprep.subr.bf16.mxu0 %v815
    %1127 = vmatpush1.bf16.msra.mxu0 %v814
    %1128 = vmatprep.subr.bf16.mxu0 %v811
    %1129 = vmatpush1.bf16.msra.mxu0 %v810
    %1130 = vmatprep.subr.bf16.mxu0 %v807
    %1131 = vmatpush1.bf16.msra.mxu0 %v806
    %1132 = vmatprep.subr.bf16.mxu0 %v803
    %1133 = vmatpush1.bf16.msra.mxu0 %v802
    %1134 = vmatprep.subr.bf16.mxu0 %v799
    %1135 = vmatpush1.bf16.msra.mxu0 %v798
    %1136 = vmatprep.subr.bf16.mxu0 %v795
    %1137 = vmatpush1.bf16.msra.mxu0 %v794
    %1138 = vmatprep.subr.bf16.mxu0 %v791
    %1139 = vmatpush1.bf16.msra.mxu0 %v790
    %1140 = vmatprep.subr.bf16.mxu0 %v787
    %1141 = vmatpush1.bf16.msra.mxu0 %v786
    %1142 = vmatprep.subr.bf16.mxu0 %v847
    %1143 = vmatpush2.bf16.msra.mxu0 %v846
    %1144 = vmatprep.subr.bf16.mxu0 %v843
    %1145 = vmatpush2.bf16.msra.mxu0 %v842
    %1146 = vmatprep.subr.bf16.mxu0 %v839
    %1147 = vmatpush2.bf16.msra.mxu0 %v838
    %1148 = vmatprep.subr.bf16.mxu0 %v835
    %1149 = vmatpush2.bf16.msra.mxu0 %v834
    %1150 = vmatprep.subr.bf16.mxu0 %v831
    %1151 = vmatpush2.bf16.msra.mxu0 %v830
    %1152 = vmatprep.subr.bf16.mxu0 %v827
    %1153 = vmatpush2.bf16.msra.mxu0 %v826
    %1154 = vmatprep.subr.bf16.mxu0 %v823
    %1155 = vmatpush2.bf16.msra.mxu0 %v822
    %1156 = vmatprep.subr.bf16.mxu0 %v819
    %1157 = vmatpush2.bf16.msra.mxu0 %v818
    %1158 = vmatprep.mubr.bf16.mxu0 %v393
    %1159 = vmatmul.mubr.bf16.gmra.mxu0 %v392
    %v1160 = vpop.f32.mrf.mxu0
    %v1161 = vadd.f32 0.0, %v1160
    %v1162 = vpop.f32.mrf.mxu0
    %v1163 = vadd.f32 0.0, %v1162
    %v1164 = vpop.f32.mrf.mxu0
    %v1165 = vadd.f32 0.0, %v1164
    %v1166 = vpop.f32.mrf.mxu0
    %v1167 = vadd.f32 0.0, %v1166
    %1168 = vdwg.mxu0
    %1169 = vmatprep.subr.bf16.mxu0 %v879
    %1170 = vmatpush1.bf16.msra.mxu0 %v878
    %1171 = vmatprep.subr.bf16.mxu0 %v875
    %1172 = vmatpush1.bf16.msra.mxu0 %v874
    %1173 = vmatprep.subr.bf16.mxu0 %v871
    %1174 = vmatpush1.bf16.msra.mxu0 %v870
    %1175 = vmatprep.subr.bf16.mxu0 %v867
    %1176 = vmatpush1.bf16.msra.mxu0 %v866
    %1177 = vmatprep.subr.bf16.mxu0 %v863
    %1178 = vmatpush1.bf16.msra.mxu0 %v862
    %1179 = vmatprep.subr.bf16.mxu0 %v859
    %1180 = vmatpush1.bf16.msra.mxu0 %v858
    %1181 = vmatprep.subr.bf16.mxu0 %v855
    %1182 = vmatpush1.bf16.msra.mxu0 %v854
    %1183 = vmatprep.subr.bf16.mxu0 %v851
    %1184 = vmatpush1.bf16.msra.mxu0 %v850
    %1185 = vmatprep.subr.bf16.mxu0 %v911
    %1186 = vmatpush2.bf16.msra.mxu0 %v910
    %1187 = vmatprep.subr.bf16.mxu0 %v907
    %1188 = vmatpush2.bf16.msra.mxu0 %v906
    %1189 = vmatprep.subr.bf16.mxu0 %v903
    %1190 = vmatpush2.bf16.msra.mxu0 %v902
    %1191 = vmatprep.subr.bf16.mxu0 %v899
    %1192 = vmatpush2.bf16.msra.mxu0 %v898
    %1193 = vmatprep.subr.bf16.mxu0 %v895
    %1194 = vmatpush2.bf16.msra.mxu0 %v894
    %1195 = vmatprep.subr.bf16.mxu0 %v891
    %1196 = vmatpush2.bf16.msra.mxu0 %v890
    %1197 = vmatprep.subr.bf16.mxu0 %v887
    %1198 = vmatpush2.bf16.msra.mxu0 %v886
    %1199 = vmatprep.subr.bf16.mxu0 %v883
    %1200 = vmatpush2.bf16.msra.mxu0 %v882
    %1201 = vmatprep.mubr.bf16.mxu0 %v395
    %1202 = vmatmul.mubr.bf16.gmra.mxu0 %v394
    %v1203 = vpop.f32.mrf.mxu0
    %v1204 = vadd.f32 %v1161, %v1203
    %v1205 = vpop.f32.mrf.mxu0
    %v1206 = vadd.f32 %v1163, %v1205
    %v1207 = vpop.f32.mrf.mxu0
    %v1208 = vadd.f32 %v1165, %v1207
    %v1209 = vpop.f32.mrf.mxu0
    %v1210 = vadd.f32 %v1167, %v1209
    %1211 = vdwg.mxu0
    %v1216 = vunpack.c.l.b16 %v116
    %v1217 = vunpack.c.h.b16 %v116
    %v1218 = vunpack.c.l.b16 %v117
    %v1219 = vunpack.c.h.b16 %v117
    %v1220 = vunpack.c.l.b16 %v118
    %v1221 = vunpack.c.h.b16 %v118
    %v1222 = vunpack.c.l.b16 %v119
    %v1223 = vunpack.c.h.b16 %v119
    %v1224 = vpack.c.b16 %v1220, %v1216
    %v1225 = vpack.c.b16 %v1221, %v1217
    %v1226 = vpack.c.b16 %v1222, %v1218
    %v1227 = vpack.c.b16 %v1223, %v1219
    %v1360 = vunpack.c.l.b16 %v124
    %v1361 = vunpack.c.h.b16 %v124
    %v1362 = vunpack.c.l.b16 %v125
    %v1363 = vunpack.c.h.b16 %v125
    %v1364 = vunpack.c.l.b16 %v126
    %v1365 = vunpack.c.h.b16 %v126
    %v1366 = vunpack.c.l.b16 %v127
    %v1367 = vunpack.c.h.b16 %v127
    %v1368 = vunpack.c.l.b16 %v128
    %v1369 = vunpack.c.h.b16 %v128
    %v1370 = vunpack.c.l.b16 %v129
    %v1371 = vunpack.c.h.b16 %v129
    %v1372 = vunpack.c.l.b16 %v130
    %v1373 = vunpack.c.h.b16 %v130
    %v1374 = vunpack.c.l.b16 %v131
    %v1375 = vunpack.c.h.b16 %v131
    %v1376 = vunpack.c.l.b16 %v132
    %v1377 = vunpack.c.h.b16 %v132
    %v1378 = vunpack.c.l.b16 %v133
    %v1379 = vunpack.c.h.b16 %v133
    %v1380 = vunpack.c.l.b16 %v134
    %v1381 = vunpack.c.h.b16 %v134
    %v1382 = vunpack.c.l.b16 %v135
    %v1383 = vunpack.c.h.b16 %v135
    %v1384 = vunpack.c.l.b16 %v136
    %v1385 = vunpack.c.h.b16 %v136
    %v1386 = vunpack.c.l.b16 %v137
    %v1387 = vunpack.c.h.b16 %v137
    %v1388 = vunpack.c.l.b16 %v138
    %v1389 = vunpack.c.h.b16 %v138
    %v1390 = vunpack.c.l.b16 %v139
    %v1391 = vunpack.c.h.b16 %v139
    %v1392 = vunpack.c.l.b16 %v140
    %v1393 = vunpack.c.h.b16 %v140
    %v1394 = vunpack.c.l.b16 %v141
    %v1395 = vunpack.c.h.b16 %v141
    %v1396 = vunpack.c.l.b16 %v142
    %v1397 = vunpack.c.h.b16 %v142
    %v1398 = vunpack.c.l.b16 %v143
    %v1399 = vunpack.c.h.b16 %v143
    %v1400 = vunpack.c.l.b16 %v144
    %v1401 = vunpack.c.h.b16 %v144
    %v1402 = vunpack.c.l.b16 %v145
    %v1403 = vunpack.c.h.b16 %v145
    %v1404 = vunpack.c.l.b16 %v146
    %v1405 = vunpack.c.h.b16 %v146
    %v1406 = vunpack.c.l.b16 %v147
    %v1407 = vunpack.c.h.b16 %v147
    %v1408 = vunpack.c.l.b16 %v148
    %v1409 = vunpack.c.h.b16 %v148
    %v1410 = vunpack.c.l.b16 %v149
    %v1411 = vunpack.c.h.b16 %v149
    %v1412 = vunpack.c.l.b16 %v150
    %v1413 = vunpack.c.h.b16 %v150
    %v1414 = vunpack.c.l.b16 %v151
    %v1415 = vunpack.c.h.b16 %v151
    %v1416 = vunpack.c.l.b16 %v152
    %v1417 = vunpack.c.h.b16 %v152
    %v1418 = vunpack.c.l.b16 %v153
    %v1419 = vunpack.c.h.b16 %v153
    %v1420 = vunpack.c.l.b16 %v154
    %v1421 = vunpack.c.h.b16 %v154
    %v1422 = vunpack.c.l.b16 %v155
    %v1423 = vunpack.c.h.b16 %v155
    %v1424 = vunpack.c.l.b16 %v156
    %v1425 = vunpack.c.h.b16 %v156
    %v1426 = vunpack.c.l.b16 %v157
    %v1427 = vunpack.c.h.b16 %v157
    %v1428 = vunpack.c.l.b16 %v158
    %v1429 = vunpack.c.h.b16 %v158
    %v1430 = vunpack.c.l.b16 %v159
    %v1431 = vunpack.c.h.b16 %v159
    %v1432 = vunpack.c.l.b16 %v160
    %v1433 = vunpack.c.h.b16 %v160
    %v1434 = vunpack.c.l.b16 %v161
    %v1435 = vunpack.c.h.b16 %v161
    %v1436 = vunpack.c.l.b16 %v162
    %v1437 = vunpack.c.h.b16 %v162
    %v1438 = vunpack.c.l.b16 %v163
    %v1439 = vunpack.c.h.b16 %v163
    %v1440 = vunpack.c.l.b16 %v164
    %v1441 = vunpack.c.h.b16 %v164
    %v1442 = vunpack.c.l.b16 %v165
    %v1443 = vunpack.c.h.b16 %v165
    %v1444 = vunpack.c.l.b16 %v166
    %v1445 = vunpack.c.h.b16 %v166
    %v1446 = vunpack.c.l.b16 %v167
    %v1447 = vunpack.c.h.b16 %v167
    %v1448 = vunpack.c.l.b16 %v168
    %v1449 = vunpack.c.h.b16 %v168
    %v1450 = vunpack.c.l.b16 %v169
    %v1451 = vunpack.c.h.b16 %v169
    %v1452 = vunpack.c.l.b16 %v170
    %v1453 = vunpack.c.h.b16 %v170
    %v1454 = vunpack.c.l.b16 %v171
    %v1455 = vunpack.c.h.b16 %v171
    %v1456 = vunpack.c.l.b16 %v172
    %v1457 = vunpack.c.h.b16 %v172
    %v1458 = vunpack.c.l.b16 %v173
    %v1459 = vunpack.c.h.b16 %v173
    %v1460 = vunpack.c.l.b16 %v174
    %v1461 = vunpack.c.h.b16 %v174
    %v1462 = vunpack.c.l.b16 %v175
    %v1463 = vunpack.c.h.b16 %v175
    %v1464 = vunpack.c.l.b16 %v176
    %v1465 = vunpack.c.h.b16 %v176
    %v1466 = vunpack.c.l.b16 %v177
    %v1467 = vunpack.c.h.b16 %v177
    %v1468 = vunpack.c.l.b16 %v178
    %v1469 = vunpack.c.h.b16 %v178
    %v1470 = vunpack.c.l.b16 %v179
    %v1471 = vunpack.c.h.b16 %v179
    %v1472 = vunpack.c.l.b16 %v180
    %v1473 = vunpack.c.h.b16 %v180
    %v1474 = vunpack.c.l.b16 %v181
    %v1475 = vunpack.c.h.b16 %v181
    %v1476 = vunpack.c.l.b16 %v182
    %v1477 = vunpack.c.h.b16 %v182
    %v1478 = vunpack.c.l.b16 %v183
    %v1479 = vunpack.c.h.b16 %v183
    %v1480 = vunpack.c.l.b16 %v184
    %v1481 = vunpack.c.h.b16 %v184
    %v1482 = vunpack.c.l.b16 %v185
    %v1483 = vunpack.c.h.b16 %v185
    %v1484 = vunpack.c.l.b16 %v186
    %v1485 = vunpack.c.h.b16 %v186
    %v1486 = vunpack.c.l.b16 %v187
    %v1487 = vunpack.c.h.b16 %v187
    %v1488 = vunpack.c.l.b16 %v188
    %v1489 = vunpack.c.h.b16 %v188
    %v1490 = vunpack.c.l.b16 %v189
    %v1491 = vunpack.c.h.b16 %v189
    %v1492 = vunpack.c.l.b16 %v190
    %v1493 = vunpack.c.h.b16 %v190
    %v1494 = vunpack.c.l.b16 %v191
    %v1495 = vunpack.c.h.b16 %v191
    %v1496 = vunpack.c.l.b16 %v192
    %v1497 = vunpack.c.h.b16 %v192
    %v1498 = vunpack.c.l.b16 %v193
    %v1499 = vunpack.c.h.b16 %v193
    %v1500 = vunpack.c.l.b16 %v194
    %v1501 = vunpack.c.h.b16 %v194
    %v1502 = vunpack.c.l.b16 %v195
    %v1503 = vunpack.c.h.b16 %v195
    %v1504 = vunpack.c.l.b16 %v196
    %v1505 = vunpack.c.h.b16 %v196
    %v1506 = vunpack.c.l.b16 %v197
    %v1507 = vunpack.c.h.b16 %v197
    %v1508 = vunpack.c.l.b16 %v198
    %v1509 = vunpack.c.h.b16 %v198
    %v1510 = vunpack.c.l.b16 %v199
    %v1511 = vunpack.c.h.b16 %v199
    %v1512 = vunpack.c.l.b16 %v200
    %v1513 = vunpack.c.h.b16 %v200
    %v1514 = vunpack.c.l.b16 %v201
    %v1515 = vunpack.c.h.b16 %v201
    %v1516 = vunpack.c.l.b16 %v202
    %v1517 = vunpack.c.h.b16 %v202
    %v1518 = vunpack.c.l.b16 %v203
    %v1519 = vunpack.c.h.b16 %v203
    %v1520 = vunpack.c.l.b16 %v204
    %v1521 = vunpack.c.h.b16 %v204
    %v1522 = vunpack.c.l.b16 %v205
    %v1523 = vunpack.c.h.b16 %v205
    %v1524 = vunpack.c.l.b16 %v206
    %v1525 = vunpack.c.h.b16 %v206
    %v1526 = vunpack.c.l.b16 %v207
    %v1527 = vunpack.c.h.b16 %v207
    %v1528 = vunpack.c.l.b16 %v208
    %v1529 = vunpack.c.h.b16 %v208
    %v1530 = vunpack.c.l.b16 %v209
    %v1531 = vunpack.c.h.b16 %v209
    %v1532 = vunpack.c.l.b16 %v210
    %v1533 = vunpack.c.h.b16 %v210
    %v1534 = vunpack.c.l.b16 %v211
    %v1535 = vunpack.c.h.b16 %v211
    %v1536 = vunpack.c.l.b16 %v212
    %v1537 = vunpack.c.h.b16 %v212
    %v1538 = vunpack.c.l.b16 %v213
    %v1539 = vunpack.c.h.b16 %v213
    %v1540 = vunpack.c.l.b16 %v214
    %v1541 = vunpack.c.h.b16 %v214
    %v1542 = vunpack.c.l.b16 %v215
    %v1543 = vunpack.c.h.b16 %v215
    %v1544 = vunpack.c.l.b16 %v216
    %v1545 = vunpack.c.h.b16 %v216
    %v1546 = vunpack.c.l.b16 %v217
    %v1547 = vunpack.c.h.b16 %v217
    %v1548 = vunpack.c.l.b16 %v218
    %v1549 = vunpack.c.h.b16 %v218
    %v1550 = vunpack.c.l.b16 %v219
    %v1551 = vunpack.c.h.b16 %v219
    %v1552 = vunpack.c.l.b16 %v220
    %v1553 = vunpack.c.h.b16 %v220
    %v1554 = vunpack.c.l.b16 %v221
    %v1555 = vunpack.c.h.b16 %v221
    %v1556 = vunpack.c.l.b16 %v222
    %v1557 = vunpack.c.h.b16 %v222
    %v1558 = vunpack.c.l.b16 %v223
    %v1559 = vunpack.c.h.b16 %v223
    %v1560 = vunpack.c.l.b16 %v224
    %v1561 = vunpack.c.h.b16 %v224
    %v1562 = vunpack.c.l.b16 %v225
    %v1563 = vunpack.c.h.b16 %v225
    %v1564 = vunpack.c.l.b16 %v226
    %v1565 = vunpack.c.h.b16 %v226
    %v1566 = vunpack.c.l.b16 %v227
    %v1567 = vunpack.c.h.b16 %v227
    %v1568 = vunpack.c.l.b16 %v228
    %v1569 = vunpack.c.h.b16 %v228
    %v1570 = vunpack.c.l.b16 %v229
    %v1571 = vunpack.c.h.b16 %v229
    %v1572 = vunpack.c.l.b16 %v230
    %v1573 = vunpack.c.h.b16 %v230
    %v1574 = vunpack.c.l.b16 %v231
    %v1575 = vunpack.c.h.b16 %v231
    %v1576 = vunpack.c.l.b16 %v232
    %v1577 = vunpack.c.h.b16 %v232
    %v1578 = vunpack.c.l.b16 %v233
    %v1579 = vunpack.c.h.b16 %v233
    %v1580 = vunpack.c.l.b16 %v234
    %v1581 = vunpack.c.h.b16 %v234
    %v1582 = vunpack.c.l.b16 %v235
    %v1583 = vunpack.c.h.b16 %v235
    %v1584 = vunpack.c.l.b16 %v236
    %v1585 = vunpack.c.h.b16 %v236
    %v1586 = vunpack.c.l.b16 %v237
    %v1587 = vunpack.c.h.b16 %v237
    %v1588 = vunpack.c.l.b16 %v238
    %v1589 = vunpack.c.h.b16 %v238
    %v1590 = vunpack.c.l.b16 %v239
    %v1591 = vunpack.c.h.b16 %v239
    %v1592 = vunpack.c.l.b16 %v240
    %v1593 = vunpack.c.h.b16 %v240
    %v1594 = vunpack.c.l.b16 %v241
    %v1595 = vunpack.c.h.b16 %v241
    %v1596 = vunpack.c.l.b16 %v242
    %v1597 = vunpack.c.h.b16 %v242
    %v1598 = vunpack.c.l.b16 %v243
    %v1599 = vunpack.c.h.b16 %v243
    %v1600 = vunpack.c.l.b16 %v244
    %v1601 = vunpack.c.h.b16 %v244
    %v1602 = vunpack.c.l.b16 %v245
    %v1603 = vunpack.c.h.b16 %v245
    %v1604 = vunpack.c.l.b16 %v246
    %v1605 = vunpack.c.h.b16 %v246
    %v1606 = vunpack.c.l.b16 %v247
    %v1607 = vunpack.c.h.b16 %v247
    %v1608 = vunpack.c.l.b16 %v248
    %v1609 = vunpack.c.h.b16 %v248
    %v1610 = vunpack.c.l.b16 %v249
    %v1611 = vunpack.c.h.b16 %v249
    %v1612 = vunpack.c.l.b16 %v250
    %v1613 = vunpack.c.h.b16 %v250
    %v1614 = vunpack.c.l.b16 %v251
    %v1615 = vunpack.c.h.b16 %v251
    %v1616 = vpack.c.b16 %v1364, %v1360
    %v1617 = vpack.c.b16 %v1365, %v1361
    %v1618 = vpack.c.b16 %v1366, %v1362
    %v1619 = vpack.c.b16 %v1367, %v1363
    %v1620 = vpack.c.b16 %v1372, %v1368
    %v1621 = vpack.c.b16 %v1373, %v1369
    %v1622 = vpack.c.b16 %v1374, %v1370
    %v1623 = vpack.c.b16 %v1375, %v1371
    %v1624 = vpack.c.b16 %v1380, %v1376
    %v1625 = vpack.c.b16 %v1381, %v1377
    %v1626 = vpack.c.b16 %v1382, %v1378
    %v1627 = vpack.c.b16 %v1383, %v1379
    %v1628 = vpack.c.b16 %v1388, %v1384
    %v1629 = vpack.c.b16 %v1389, %v1385
    %v1630 = vpack.c.b16 %v1390, %v1386
    %v1631 = vpack.c.b16 %v1391, %v1387
    %v1632 = vpack.c.b16 %v1396, %v1392
    %v1633 = vpack.c.b16 %v1397, %v1393
    %v1634 = vpack.c.b16 %v1398, %v1394
    %v1635 = vpack.c.b16 %v1399, %v1395
    %v1636 = vpack.c.b16 %v1404, %v1400
    %v1637 = vpack.c.b16 %v1405, %v1401
    %v1638 = vpack.c.b16 %v1406, %v1402
    %v1639 = vpack.c.b16 %v1407, %v1403
    %v1640 = vpack.c.b16 %v1412, %v1408
    %v1641 = vpack.c.b16 %v1413, %v1409
    %v1642 = vpack.c.b16 %v1414, %v1410
    %v1643 = vpack.c.b16 %v1415, %v1411
    %v1644 = vpack.c.b16 %v1420, %v1416
    %v1645 = vpack.c.b16 %v1421, %v1417
    %v1646 = vpack.c.b16 %v1422, %v1418
    %v1647 = vpack.c.b16 %v1423, %v1419
    %v1648 = vpack.c.b16 %v1428, %v1424
    %v1649 = vpack.c.b16 %v1429, %v1425
    %v1650 = vpack.c.b16 %v1430, %v1426
    %v1651 = vpack.c.b16 %v1431, %v1427
    %v1652 = vpack.c.b16 %v1436, %v1432
    %v1653 = vpack.c.b16 %v1437, %v1433
    %v1654 = vpack.c.b16 %v1438, %v1434
    %v1655 = vpack.c.b16 %v1439, %v1435
    %v1656 = vpack.c.b16 %v1444, %v1440
    %v1657 = vpack.c.b16 %v1445, %v1441
    %v1658 = vpack.c.b16 %v1446, %v1442
    %v1659 = vpack.c.b16 %v1447, %v1443
    %v1660 = vpack.c.b16 %v1452, %v1448
    %v1661 = vpack.c.b16 %v1453, %v1449
    %v1662 = vpack.c.b16 %v1454, %v1450
    %v1663 = vpack.c.b16 %v1455, %v1451
    %v1664 = vpack.c.b16 %v1460, %v1456
    %v1665 = vpack.c.b16 %v1461, %v1457
    %v1666 = vpack.c.b16 %v1462, %v1458
    %v1667 = vpack.c.b16 %v1463, %v1459
    %v1668 = vpack.c.b16 %v1468, %v1464
    %v1669 = vpack.c.b16 %v1469, %v1465
    %v1670 = vpack.c.b16 %v1470, %v1466
    %v1671 = vpack.c.b16 %v1471, %v1467
    %v1672 = vpack.c.b16 %v1476, %v1472
    %v1673 = vpack.c.b16 %v1477, %v1473
    %v1674 = vpack.c.b16 %v1478, %v1474
    %v1675 = vpack.c.b16 %v1479, %v1475
    %v1676 = vpack.c.b16 %v1484, %v1480
    %v1677 = vpack.c.b16 %v1485, %v1481
    %v1678 = vpack.c.b16 %v1486, %v1482
    %v1679 = vpack.c.b16 %v1487, %v1483
    %v1680 = vpack.c.b16 %v1492, %v1488
    %v1681 = vpack.c.b16 %v1493, %v1489
    %v1682 = vpack.c.b16 %v1494, %v1490
    %v1683 = vpack.c.b16 %v1495, %v1491
    %v1684 = vpack.c.b16 %v1500, %v1496
    %v1685 = vpack.c.b16 %v1501, %v1497
    %v1686 = vpack.c.b16 %v1502, %v1498
    %v1687 = vpack.c.b16 %v1503, %v1499
    %v1688 = vpack.c.b16 %v1508, %v1504
    %v1689 = vpack.c.b16 %v1509, %v1505
    %v1690 = vpack.c.b16 %v1510, %v1506
    %v1691 = vpack.c.b16 %v1511, %v1507
    %v1692 = vpack.c.b16 %v1516, %v1512
    %v1693 = vpack.c.b16 %v1517, %v1513
    %v1694 = vpack.c.b16 %v1518, %v1514
    %v1695 = vpack.c.b16 %v1519, %v1515
    %v1696 = vpack.c.b16 %v1524, %v1520
    %v1697 = vpack.c.b16 %v1525, %v1521
    %v1698 = vpack.c.b16 %v1526, %v1522
    %v1699 = vpack.c.b16 %v1527, %v1523
    %v1700 = vpack.c.b16 %v1532, %v1528
    %v1701 = vpack.c.b16 %v1533, %v1529
    %v1702 = vpack.c.b16 %v1534, %v1530
    %v1703 = vpack.c.b16 %v1535, %v1531
    %v1704 = vpack.c.b16 %v1540, %v1536
    %v1705 = vpack.c.b16 %v1541, %v1537
    %v1706 = vpack.c.b16 %v1542, %v1538
    %v1707 = vpack.c.b16 %v1543, %v1539
    %v1708 = vpack.c.b16 %v1548, %v1544
    %v1709 = vpack.c.b16 %v1549, %v1545
    %v1710 = vpack.c.b16 %v1550, %v1546
    %v1711 = vpack.c.b16 %v1551, %v1547
    %v1712 = vpack.c.b16 %v1556, %v1552
    %v1713 = vpack.c.b16 %v1557, %v1553
    %v1714 = vpack.c.b16 %v1558, %v1554
    %v1715 = vpack.c.b16 %v1559, %v1555
    %v1716 = vpack.c.b16 %v1564, %v1560
    %v1717 = vpack.c.b16 %v1565, %v1561
    %v1718 = vpack.c.b16 %v1566, %v1562
    %v1719 = vpack.c.b16 %v1567, %v1563
    %v1720 = vpack.c.b16 %v1572, %v1568
    %v1721 = vpack.c.b16 %v1573, %v1569
    %v1722 = vpack.c.b16 %v1574, %v1570
    %v1723 = vpack.c.b16 %v1575, %v1571
    %v1724 = vpack.c.b16 %v1580, %v1576
    %v1725 = vpack.c.b16 %v1581, %v1577
    %v1726 = vpack.c.b16 %v1582, %v1578
    %v1727 = vpack.c.b16 %v1583, %v1579
    %v1728 = vpack.c.b16 %v1588, %v1584
    %v1729 = vpack.c.b16 %v1589, %v1585
    %v1730 = vpack.c.b16 %v1590, %v1586
    %v1731 = vpack.c.b16 %v1591, %v1587
    %v1732 = vpack.c.b16 %v1596, %v1592
    %v1733 = vpack.c.b16 %v1597, %v1593
    %v1734 = vpack.c.b16 %v1598, %v1594
    %v1735 = vpack.c.b16 %v1599, %v1595
    %v1736 = vpack.c.b16 %v1604, %v1600
    %v1737 = vpack.c.b16 %v1605, %v1601
    %v1738 = vpack.c.b16 %v1606, %v1602
    %v1739 = vpack.c.b16 %v1607, %v1603
    %v1740 = vpack.c.b16 %v1612, %v1608
    %v1741 = vpack.c.b16 %v1613, %v1609
    %v1742 = vpack.c.b16 %v1614, %v1610
    %v1743 = vpack.c.b16 %v1615, %v1611
    %1872 = vmatprep.subr.bf16.mxu0 %v1645
    %1873 = vmatpush1.bf16.msra.mxu0 %v1644
    %1874 = vmatprep.subr.bf16.mxu0 %v1641
    %1875 = vmatpush1.bf16.msra.mxu0 %v1640
    %1876 = vmatprep.subr.bf16.mxu0 %v1637
    %1877 = vmatpush1.bf16.msra.mxu0 %v1636
    %1878 = vmatprep.subr.bf16.mxu0 %v1633
    %1879 = vmatpush1.bf16.msra.mxu0 %v1632
    %1880 = vmatprep.subr.bf16.mxu0 %v1629
    %1881 = vmatpush1.bf16.msra.mxu0 %v1628
    %1882 = vmatprep.subr.bf16.mxu0 %v1625
    %1883 = vmatpush1.bf16.msra.mxu0 %v1624
    %1884 = vmatprep.subr.bf16.mxu0 %v1621
    %1885 = vmatpush1.bf16.msra.mxu0 %v1620
    %1886 = vmatprep.subr.bf16.mxu0 %v1617
    %1887 = vmatpush1.bf16.msra.mxu0 %v1616
    %1888 = vmatprep.subr.bf16.mxu0 %v1677
    %1889 = vmatpush2.bf16.msra.mxu0 %v1676
    %1890 = vmatprep.subr.bf16.mxu0 %v1673
    %1891 = vmatpush2.bf16.msra.mxu0 %v1672
    %1892 = vmatprep.subr.bf16.mxu0 %v1669
    %1893 = vmatpush2.bf16.msra.mxu0 %v1668
    %1894 = vmatprep.subr.bf16.mxu0 %v1665
    %1895 = vmatpush2.bf16.msra.mxu0 %v1664
    %1896 = vmatprep.subr.bf16.mxu0 %v1661
    %1897 = vmatpush2.bf16.msra.mxu0 %v1660
    %1898 = vmatprep.subr.bf16.mxu0 %v1657
    %1899 = vmatpush2.bf16.msra.mxu0 %v1656
    %1900 = vmatprep.subr.bf16.mxu0 %v1653
    %1901 = vmatpush2.bf16.msra.mxu0 %v1652
    %1902 = vmatprep.subr.bf16.mxu0 %v1649
    %1903 = vmatpush2.bf16.msra.mxu0 %v1648
    %1904 = vmatprep.mubr.bf16.mxu0 %v1225
    %1905 = vmatmul.mubr.bf16.gmra.mxu0 %v1224
    %v1906 = vpop.f32.mrf.mxu0
    %v1907 = vadd.f32 %v1118, %v1906
    %v1908 = vpop.f32.mrf.mxu0
    %v1909 = vadd.f32 %v1120, %v1908
    %v1910 = vpop.f32.mrf.mxu0
    %v1911 = vadd.f32 %v1122, %v1910
    %v1912 = vpop.f32.mrf.mxu0
    %v1913 = vadd.f32 %v1124, %v1912
    %1914 = vdwg.mxu0
    %1915 = vmatprep.subr.bf16.mxu0 %v1709
    %1916 = vmatpush1.bf16.msra.mxu0 %v1708
    %1917 = vmatprep.subr.bf16.mxu0 %v1705
    %1918 = vmatpush1.bf16.msra.mxu0 %v1704
    %1919 = vmatprep.subr.bf16.mxu0 %v1701
    %1920 = vmatpush1.bf16.msra.mxu0 %v1700
    %1921 = vmatprep.subr.bf16.mxu0 %v1697
    %1922 = vmatpush1.bf16.msra.mxu0 %v1696
    %1923 = vmatprep.subr.bf16.mxu0 %v1693
    %1924 = vmatpush1.bf16.msra.mxu0 %v1692
    %1925 = vmatprep.subr.bf16.mxu0 %v1689
    %1926 = vmatpush1.bf16.msra.mxu0 %v1688
    %1927 = vmatprep.subr.bf16.mxu0 %v1685
    %1928 = vmatpush1.bf16.msra.mxu0 %v1684
    %1929 = vmatprep.subr.bf16.mxu0 %v1681
    %1930 = vmatpush1.bf16.msra.mxu0 %v1680
    %1931 = vmatprep.subr.bf16.mxu0 %v1741
    %1932 = vmatpush2.bf16.msra.mxu0 %v1740
    %1933 = vmatprep.subr.bf16.mxu0 %v1737
    %1934 = vmatpush2.bf16.msra.mxu0 %v1736
    %1935 = vmatprep.subr.bf16.mxu0 %v1733
    %1936 = vmatpush2.bf16.msra.mxu0 %v1732
    %1937 = vmatprep.subr.bf16.mxu0 %v1729
    %1938 = vmatpush2.bf16.msra.mxu0 %v1728
    %1939 = vmatprep.subr.bf16.mxu0 %v1725
    %1940 = vmatpush2.bf16.msra.mxu0 %v1724
    %1941 = vmatprep.subr.bf16.mxu0 %v1721
    %1942 = vmatpush2.bf16.msra.mxu0 %v1720
    %1943 = vmatprep.subr.bf16.mxu0 %v1717
    %1944 = vmatpush2.bf16.msra.mxu0 %v1716
    %1945 = vmatprep.subr.bf16.mxu0 %v1713
    %1946 = vmatpush2.bf16.msra.mxu0 %v1712
    %1947 = vmatprep.mubr.bf16.mxu0 %v1227
    %1948 = vmatmul.mubr.bf16.gmra.mxu0 %v1226
    %v1949 = vpop.f32.mrf.mxu0
    %v1950 = vadd.f32 %v1907, %v1949
    %v1951 = vpop.f32.mrf.mxu0
    %v1952 = vadd.f32 %v1909, %v1951
    %v1953 = vpop.f32.mrf.mxu0
    %v1954 = vadd.f32 %v1911, %v1953
    %v1955 = vpop.f32.mrf.mxu0
    %v1956 = vadd.f32 %v1913, %v1955
    %1957 = vdwg.mxu0
    %1958 = vmatprep.subr.bf16.mxu0 %v1647
    %1959 = vmatpush1.bf16.msra.mxu0 %v1646
    %1960 = vmatprep.subr.bf16.mxu0 %v1643
    %1961 = vmatpush1.bf16.msra.mxu0 %v1642
    %1962 = vmatprep.subr.bf16.mxu0 %v1639
    %1963 = vmatpush1.bf16.msra.mxu0 %v1638
    %1964 = vmatprep.subr.bf16.mxu0 %v1635
    %1965 = vmatpush1.bf16.msra.mxu0 %v1634
    %1966 = vmatprep.subr.bf16.mxu0 %v1631
    %1967 = vmatpush1.bf16.msra.mxu0 %v1630
    %1968 = vmatprep.subr.bf16.mxu0 %v1627
    %1969 = vmatpush1.bf16.msra.mxu0 %v1626
    %1970 = vmatprep.subr.bf16.mxu0 %v1623
    %1971 = vmatpush1.bf16.msra.mxu0 %v1622
    %1972 = vmatprep.subr.bf16.mxu0 %v1619
    %1973 = vmatpush1.bf16.msra.mxu0 %v1618
    %1974 = vmatprep.subr.bf16.mxu0 %v1679
    %1975 = vmatpush2.bf16.msra.mxu0 %v1678
    %1976 = vmatprep.subr.bf16.mxu0 %v1675
    %1977 = vmatpush2.bf16.msra.mxu0 %v1674
    %1978 = vmatprep.subr.bf16.mxu0 %v1671
    %1979 = vmatpush2.bf16.msra.mxu0 %v1670
    %1980 = vmatprep.subr.bf16.mxu0 %v1667
    %1981 = vmatpush2.bf16.msra.mxu0 %v1666
    %1982 = vmatprep.subr.bf16.mxu0 %v1663
    %1983 = vmatpush2.bf16.msra.mxu0 %v1662
    %1984 = vmatprep.subr.bf16.mxu0 %v1659
    %1985 = vmatpush2.bf16.msra.mxu0 %v1658
    %1986 = vmatprep.subr.bf16.mxu0 %v1655
    %1987 = vmatpush2.bf16.msra.mxu0 %v1654
    %1988 = vmatprep.subr.bf16.mxu0 %v1651
    %1989 = vmatpush2.bf16.msra.mxu0 %v1650
    %1990 = vmatprep.mubr.bf16.mxu0 %v1225
    %1991 = vmatmul.mubr.bf16.gmra.mxu0 %v1224
    %v1992 = vpop.f32.mrf.mxu0
    %v1993 = vadd.f32 %v1204, %v1992
    %v1994 = vpop.f32.mrf.mxu0
    %v1995 = vadd.f32 %v1206, %v1994
    %v1996 = vpop.f32.mrf.mxu0
    %v1997 = vadd.f32 %v1208, %v1996
    %v1998 = vpop.f32.mrf.mxu0
    %v1999 = vadd.f32 %v1210, %v1998
    %2000 = vdwg.mxu0
    %2001 = vmatprep.subr.bf16.mxu0 %v1711
    %2002 = vmatpush1.bf16.msra.mxu0 %v1710
    %2003 = vmatprep.subr.bf16.mxu0 %v1707
    %2004 = vmatpush1.bf16.msra.mxu0 %v1706
    %2005 = vmatprep.subr.bf16.mxu0 %v1703
    %2006 = vmatpush1.bf16.msra.mxu0 %v1702
    %2007 = vmatprep.subr.bf16.mxu0 %v1699
    %2008 = vmatpush1.bf16.msra.mxu0 %v1698
    %2009 = vmatprep.subr.bf16.mxu0 %v1695
    %2010 = vmatpush1.bf16.msra.mxu0 %v1694
    %2011 = vmatprep.subr.bf16.mxu0 %v1691
    %2012 = vmatpush1.bf16.msra.mxu0 %v1690
    %2013 = vmatprep.subr.bf16.mxu0 %v1687
    %2014 = vmatpush1.bf16.msra.mxu0 %v1686
    %2015 = vmatprep.subr.bf16.mxu0 %v1683
    %2016 = vmatpush1.bf16.msra.mxu0 %v1682
    %2017 = vmatprep.subr.bf16.mxu0 %v1743
    %2018 = vmatpush2.bf16.msra.mxu0 %v1742
    %2019 = vmatprep.subr.bf16.mxu0 %v1739
    %2020 = vmatpush2.bf16.msra.mxu0 %v1738
    %2021 = vmatprep.subr.bf16.mxu0 %v1735
    %2022 = vmatpush2.bf16.msra.mxu0 %v1734
    %2023 = vmatprep.subr.bf16.mxu0 %v1731
    %2024 = vmatpush2.bf16.msra.mxu0 %v1730
    %2025 = vmatprep.subr.bf16.mxu0 %v1727
    %2026 = vmatpush2.bf16.msra.mxu0 %v1726
    %2027 = vmatprep.subr.bf16.mxu0 %v1723
    %2028 = vmatpush2.bf16.msra.mxu0 %v1722
    %2029 = vmatprep.subr.bf16.mxu0 %v1719
    %2030 = vmatpush2.bf16.msra.mxu0 %v1718
    %2031 = vmatprep.subr.bf16.mxu0 %v1715
    %2032 = vmatpush2.bf16.msra.mxu0 %v1714
    %2033 = vmatprep.mubr.bf16.mxu0 %v1227
    %2034 = vmatmul.mubr.bf16.gmra.mxu0 %v1226
    %v2035 = vpop.f32.mrf.mxu0
    %v2036 = vadd.f32 %v1993, %v2035
    %v2037 = vpop.f32.mrf.mxu0
    %v2038 = vadd.f32 %v1995, %v2037
    %v2039 = vpop.f32.mrf.mxu0
    %v2040 = vadd.f32 %v1997, %v2039
    %v2041 = vpop.f32.mrf.mxu0
    %v2042 = vadd.f32 %v1999, %v2041
    %2043 = vdwg.mxu0
    %v2044 = vld [vmem:[%s4] sm:$0xf]
    %v2046 = vlaneseq
    %v2047 = vshrl.u32 %v2046, 7
    %v2048 = vsub.s32 0, %v2047
    %v2049 = vrot.slane %v2044, %v2048
    %v2050 = vlaneseq
    %v2051 = vshrl.u32 %v2050, 7
    %v2052 = vsub.s32 1, %v2051
    %v2053 = vrot.slane %v2044, %v2052
    %v2054 = vlaneseq
    %v2055 = vshrl.u32 %v2054, 7
    %v2056 = vsub.s32 2, %v2055
    %v2057 = vrot.slane %v2044, %v2056
    %v2058 = vlaneseq
    %v2059 = vshrl.u32 %v2058, 7
    %v2060 = vsub.s32 3, %v2059
    %v2061 = vrot.slane %v2044, %v2060
    %v2066 = vadd.f32 %v1950, %v2049
    %v2067 = vadd.f32 %v1952, %v2053
    %v2068 = vadd.f32 %v2036, %v2057
    %v2069 = vadd.f32 %v2038, %v2061
    %v2070 = vadd.f32 %v1954, %v2049
    %v2071 = vadd.f32 %v1956, %v2053
    %v2072 = vadd.f32 %v2040, %v2057
    %v2073 = vadd.f32 %v2042, %v2061
    %v2074 = vmax.f32 %v2066, 0.0
    %v2075 = vmax.f32 %v2067, 0.0
    %v2076 = vmax.f32 %v2068, 0.0
    %v2077 = vmax.f32 %v2069, 0.0
    %v2078 = vmax.f32 %v2070, 0.0
    %v2079 = vmax.f32 %v2071, 0.0
    %v2080 = vmax.f32 %v2072, 0.0
    %v2081 = vmax.f32 %v2073, 0.0
    %v2082 = vpack.c.bf16 %v2078, %v2074
    %v2083 = vpack.c.bf16 %v2079, %v2075
    %v2084 = vpack.c.bf16 %v2080, %v2076
    %v2085 = vpack.c.bf16 %v2081, %v2077
    %v2086 = vld [vmem:[#allocation10] sm:$0xff]
    %v2087 = vld [vmem:[#allocation10 + $0x8] sm:$0xff]
    %v2088 = vld [vmem:[#allocation10 + $0x10] sm:$0xff]
    %v2089 = vld [vmem:[#allocation10 + $0x18] sm:$0xff]
    %v2090 = vld [vmem:[#allocation10 + $0x20] sm:$0xff]
    %v2091 = vld [vmem:[#allocation10 + $0x28] sm:$0xff]
    %v2092 = vld [vmem:[#allocation10 + $0x30] sm:$0xff]
    %v2093 = vld [vmem:[#allocation10 + $0x38] sm:$0xff]
    %v2094 = vld [vmem:[#allocation10 + $0x40] sm:$0xff]
    %v2095 = vld [vmem:[#allocation10 + $0x48] sm:$0xff]
    %v2096 = vld [vmem:[#allocation10 + $0x50] sm:$0xff]
    %v2097 = vld [vmem:[#allocation10 + $0x58] sm:$0xff]
    %v2098 = vld [vmem:[#allocation10 + $0x60] sm:$0xff]
    %v2099 = vld [vmem:[#allocation10 + $0x68] sm:$0xff]
    %v2100 = vld [vmem:[#allocation10 + $0x70] sm:$0xff]
    %v2101 = vld [vmem:[#allocation10 + $0x78] sm:$0xff]
    %v2102 = vld [vmem:[#allocation10 + $0x80] sm:$0xff]
    %v2103 = vld [vmem:[#allocation10 + $0x88] sm:$0xff]
    %v2104 = vld [vmem:[#allocation10 + $0x90] sm:$0xff]
    %v2105 = vld [vmem:[#allocation10 + $0x98] sm:$0xff]
    %v2106 = vld [vmem:[#allocation10 + $0xa0] sm:$0xff]
    %v2107 = vld [vmem:[#allocation10 + $0xa8] sm:$0xff]
    %v2108 = vld [vmem:[#allocation10 + $0xb0] sm:$0xff]
    %v2109 = vld [vmem:[#allocation10 + $0xb8] sm:$0xff]
    %v2110 = vld [vmem:[#allocation10 + $0xc0] sm:$0xff]
    %v2111 = vld [vmem:[#allocation10 + $0xc8] sm:$0xff]
    %v2112 = vld [vmem:[#allocation10 + $0xd0] sm:$0xff]
    %v2113 = vld [vmem:[#allocation10 + $0xd8] sm:$0xff]
    %v2114 = vld [vmem:[#allocation10 + $0xe0] sm:$0xff]
    %v2115 = vld [vmem:[#allocation10 + $0xe8] sm:$0xff]
    %v2116 = vld [vmem:[#allocation10 + $0xf0] sm:$0xff]
    %v2117 = vld [vmem:[#allocation10 + $0xf8] sm:$0xff]
    %v2118 = vld [vmem:[#allocation10 + $0x100] sm:$0xff]
    %v2119 = vld [vmem:[#allocation10 + $0x108] sm:$0xff]
    %v2120 = vld [vmem:[#allocation10 + $0x110] sm:$0xff]
    %v2121 = vld [vmem:[#allocation10 + $0x118] sm:$0xff]
    %v2122 = vld [vmem:[#allocation10 + $0x120] sm:$0xff]
    %v2123 = vld [vmem:[#allocation10 + $0x128] sm:$0xff]
    %v2124 = vld [vmem:[#allocation10 + $0x130] sm:$0xff]
    %v2125 = vld [vmem:[#allocation10 + $0x138] sm:$0xff]
    %v2126 = vld [vmem:[#allocation10 + $0x140] sm:$0xff]
    %v2127 = vld [vmem:[#allocation10 + $0x148] sm:$0xff]
    %v2128 = vld [vmem:[#allocation10 + $0x150] sm:$0xff]
    %v2129 = vld [vmem:[#allocation10 + $0x158] sm:$0xff]
    %v2130 = vld [vmem:[#allocation10 + $0x160] sm:$0xff]
    %v2131 = vld [vmem:[#allocation10 + $0x168] sm:$0xff]
    %v2132 = vld [vmem:[#allocation10 + $0x170] sm:$0xff]
    %v2133 = vld [vmem:[#allocation10 + $0x178] sm:$0xff]
    %v2134 = vld [vmem:[#allocation10 + $0x180] sm:$0xff]
    %v2135 = vld [vmem:[#allocation10 + $0x188] sm:$0xff]
    %v2136 = vld [vmem:[#allocation10 + $0x190] sm:$0xff]
    %v2137 = vld [vmem:[#allocation10 + $0x198] sm:$0xff]
    %v2138 = vld [vmem:[#allocation10 + $0x1a0] sm:$0xff]
    %v2139 = vld [vmem:[#allocation10 + $0x1a8] sm:$0xff]
    %v2140 = vld [vmem:[#allocation10 + $0x1b0] sm:$0xff]
    %v2141 = vld [vmem:[#allocation10 + $0x1b8] sm:$0xff]
    %v2142 = vld [vmem:[#allocation10 + $0x1c0] sm:$0xff]
    %v2143 = vld [vmem:[#allocation10 + $0x1c8] sm:$0xff]
    %v2144 = vld [vmem:[#allocation10 + $0x1d0] sm:$0xff]
    %v2145 = vld [vmem:[#allocation10 + $0x1d8] sm:$0xff]
    %v2146 = vld [vmem:[#allocation10 + $0x1e0] sm:$0xff]
    %v2147 = vld [vmem:[#allocation10 + $0x1e8] sm:$0xff]
    %v2148 = vld [vmem:[#allocation10 + $0x1f0] sm:$0xff]
    %v2149 = vld [vmem:[#allocation10 + $0x1f8] sm:$0xff]
    %v2150 = vld [vmem:[%s6] sm:$0x3]
    %v2152 = vlaneseq
    %v2153 = vshrl.u32 %v2152, 7
    %v2154 = vsub.s32 0, %v2153
    %v2155 = vrot.slane %v2150, %v2154
    %v2156 = vlaneseq
    %v2157 = vshrl.u32 %v2156, 7
    %v2158 = vsub.s32 1, %v2157
    %v2159 = vrot.slane %v2150, %v2158
    %v2226 = vunpack.c.l.b16 %v2086
    %v2227 = vunpack.c.h.b16 %v2086
    %v2228 = vunpack.c.l.b16 %v2087
    %v2229 = vunpack.c.h.b16 %v2087
    %v2230 = vunpack.c.l.b16 %v2088
    %v2231 = vunpack.c.h.b16 %v2088
    %v2232 = vunpack.c.l.b16 %v2089
    %v2233 = vunpack.c.h.b16 %v2089
    %v2234 = vunpack.c.l.b16 %v2090
    %v2235 = vunpack.c.h.b16 %v2090
    %v2236 = vunpack.c.l.b16 %v2091
    %v2237 = vunpack.c.h.b16 %v2091
    %v2238 = vunpack.c.l.b16 %v2092
    %v2239 = vunpack.c.h.b16 %v2092
    %v2240 = vunpack.c.l.b16 %v2093
    %v2241 = vunpack.c.h.b16 %v2093
    %v2242 = vunpack.c.l.b16 %v2094
    %v2243 = vunpack.c.h.b16 %v2094
    %v2244 = vunpack.c.l.b16 %v2095
    %v2245 = vunpack.c.h.b16 %v2095
    %v2246 = vunpack.c.l.b16 %v2096
    %v2247 = vunpack.c.h.b16 %v2096
    %v2248 = vunpack.c.l.b16 %v2097
    %v2249 = vunpack.c.h.b16 %v2097
    %v2250 = vunpack.c.l.b16 %v2098
    %v2251 = vunpack.c.h.b16 %v2098
    %v2252 = vunpack.c.l.b16 %v2099
    %v2253 = vunpack.c.h.b16 %v2099
    %v2254 = vunpack.c.l.b16 %v2100
    %v2255 = vunpack.c.h.b16 %v2100
    %v2256 = vunpack.c.l.b16 %v2101
    %v2257 = vunpack.c.h.b16 %v2101
    %v2258 = vunpack.c.l.b16 %v2102
    %v2259 = vunpack.c.h.b16 %v2102
    %v2260 = vunpack.c.l.b16 %v2103
    %v2261 = vunpack.c.h.b16 %v2103
    %v2262 = vunpack.c.l.b16 %v2104
    %v2263 = vunpack.c.h.b16 %v2104
    %v2264 = vunpack.c.l.b16 %v2105
    %v2265 = vunpack.c.h.b16 %v2105
    %v2266 = vunpack.c.l.b16 %v2106
    %v2267 = vunpack.c.h.b16 %v2106
    %v2268 = vunpack.c.l.b16 %v2107
    %v2269 = vunpack.c.h.b16 %v2107
    %v2270 = vunpack.c.l.b16 %v2108
    %v2271 = vunpack.c.h.b16 %v2108
    %v2272 = vunpack.c.l.b16 %v2109
    %v2273 = vunpack.c.h.b16 %v2109
    %v2274 = vunpack.c.l.b16 %v2110
    %v2275 = vunpack.c.h.b16 %v2110
    %v2276 = vunpack.c.l.b16 %v2111
    %v2277 = vunpack.c.h.b16 %v2111
    %v2278 = vunpack.c.l.b16 %v2112
    %v2279 = vunpack.c.h.b16 %v2112
    %v2280 = vunpack.c.l.b16 %v2113
    %v2281 = vunpack.c.h.b16 %v2113
    %v2282 = vunpack.c.l.b16 %v2114
    %v2283 = vunpack.c.h.b16 %v2114
    %v2284 = vunpack.c.l.b16 %v2115
    %v2285 = vunpack.c.h.b16 %v2115
    %v2286 = vunpack.c.l.b16 %v2116
    %v2287 = vunpack.c.h.b16 %v2116
    %v2288 = vunpack.c.l.b16 %v2117
    %v2289 = vunpack.c.h.b16 %v2117
    %v2290 = vunpack.c.l.b16 %v2118
    %v2291 = vunpack.c.h.b16 %v2118
    %v2292 = vunpack.c.l.b16 %v2119
    %v2293 = vunpack.c.h.b16 %v2119
    %v2294 = vunpack.c.l.b16 %v2120
    %v2295 = vunpack.c.h.b16 %v2120
    %v2296 = vunpack.c.l.b16 %v2121
    %v2297 = vunpack.c.h.b16 %v2121
    %v2298 = vunpack.c.l.b16 %v2122
    %v2299 = vunpack.c.h.b16 %v2122
    %v2300 = vunpack.c.l.b16 %v2123
    %v2301 = vunpack.c.h.b16 %v2123
    %v2302 = vunpack.c.l.b16 %v2124
    %v2303 = vunpack.c.h.b16 %v2124
    %v2304 = vunpack.c.l.b16 %v2125
    %v2305 = vunpack.c.h.b16 %v2125
    %v2306 = vunpack.c.l.b16 %v2126
    %v2307 = vunpack.c.h.b16 %v2126
    %v2308 = vunpack.c.l.b16 %v2127
    %v2309 = vunpack.c.h.b16 %v2127
    %v2310 = vunpack.c.l.b16 %v2128
    %v2311 = vunpack.c.h.b16 %v2128
    %v2312 = vunpack.c.l.b16 %v2129
    %v2313 = vunpack.c.h.b16 %v2129
    %v2314 = vunpack.c.l.b16 %v2130
    %v2315 = vunpack.c.h.b16 %v2130
    %v2316 = vunpack.c.l.b16 %v2131
    %v2317 = vunpack.c.h.b16 %v2131
    %v2318 = vunpack.c.l.b16 %v2132
    %v2319 = vunpack.c.h.b16 %v2132
    %v2320 = vunpack.c.l.b16 %v2133
    %v2321 = vunpack.c.h.b16 %v2133
    %v2322 = vunpack.c.l.b16 %v2134
    %v2323 = vunpack.c.h.b16 %v2134
    %v2324 = vunpack.c.l.b16 %v2135
    %v2325 = vunpack.c.h.b16 %v2135
    %v2326 = vunpack.c.l.b16 %v2136
    %v2327 = vunpack.c.h.b16 %v2136
    %v2328 = vunpack.c.l.b16 %v2137
    %v2329 = vunpack.c.h.b16 %v2137
    %v2330 = vunpack.c.l.b16 %v2138
    %v2331 = vunpack.c.h.b16 %v2138
    %v2332 = vunpack.c.l.b16 %v2139
    %v2333 = vunpack.c.h.b16 %v2139
    %v2334 = vunpack.c.l.b16 %v2140
    %v2335 = vunpack.c.h.b16 %v2140
    %v2336 = vunpack.c.l.b16 %v2141
    %v2337 = vunpack.c.h.b16 %v2141
    %v2338 = vunpack.c.l.b16 %v2142
    %v2339 = vunpack.c.h.b16 %v2142
    %v2340 = vunpack.c.l.b16 %v2143
    %v2341 = vunpack.c.h.b16 %v2143
    %v2342 = vunpack.c.l.b16 %v2144
    %v2343 = vunpack.c.h.b16 %v2144
    %v2344 = vunpack.c.l.b16 %v2145
    %v2345 = vunpack.c.h.b16 %v2145
    %v2346 = vunpack.c.l.b16 %v2146
    %v2347 = vunpack.c.h.b16 %v2146
    %v2348 = vunpack.c.l.b16 %v2147
    %v2349 = vunpack.c.h.b16 %v2147
    %v2350 = vunpack.c.l.b16 %v2148
    %v2351 = vunpack.c.h.b16 %v2148
    %v2352 = vunpack.c.l.b16 %v2149
    %v2353 = vunpack.c.h.b16 %v2149
    %v2354 = vpack.c.b16 %v2228, %v2226
    %v2355 = vpack.c.b16 %v2229, %v2227
    %v2356 = vpack.c.b16 %v2232, %v2230
    %v2357 = vpack.c.b16 %v2233, %v2231
    %v2358 = vpack.c.b16 %v2236, %v2234
    %v2359 = vpack.c.b16 %v2237, %v2235
    %v2360 = vpack.c.b16 %v2240, %v2238
    %v2361 = vpack.c.b16 %v2241, %v2239
    %v2362 = vpack.c.b16 %v2244, %v2242
    %v2363 = vpack.c.b16 %v2245, %v2243
    %v2364 = vpack.c.b16 %v2248, %v2246
    %v2365 = vpack.c.b16 %v2249, %v2247
    %v2366 = vpack.c.b16 %v2252, %v2250
    %v2367 = vpack.c.b16 %v2253, %v2251
    %v2368 = vpack.c.b16 %v2256, %v2254
    %v2369 = vpack.c.b16 %v2257, %v2255
    %v2370 = vpack.c.b16 %v2260, %v2258
    %v2371 = vpack.c.b16 %v2261, %v2259
    %v2372 = vpack.c.b16 %v2264, %v2262
    %v2373 = vpack.c.b16 %v2265, %v2263
    %v2374 = vpack.c.b16 %v2268, %v2266
    %v2375 = vpack.c.b16 %v2269, %v2267
    %v2376 = vpack.c.b16 %v2272, %v2270
    %v2377 = vpack.c.b16 %v2273, %v2271
    %v2378 = vpack.c.b16 %v2276, %v2274
    %v2379 = vpack.c.b16 %v2277, %v2275
    %v2380 = vpack.c.b16 %v2280, %v2278
    %v2381 = vpack.c.b16 %v2281, %v2279
    %v2382 = vpack.c.b16 %v2284, %v2282
    %v2383 = vpack.c.b16 %v2285, %v2283
    %v2384 = vpack.c.b16 %v2288, %v2286
    %v2385 = vpack.c.b16 %v2289, %v2287
    %v2386 = vpack.c.b16 %v2292, %v2290
    %v2387 = vpack.c.b16 %v2293, %v2291
    %v2388 = vpack.c.b16 %v2296, %v2294
    %v2389 = vpack.c.b16 %v2297, %v2295
    %v2390 = vpack.c.b16 %v2300, %v2298
    %v2391 = vpack.c.b16 %v2301, %v2299
    %v2392 = vpack.c.b16 %v2304, %v2302
    %v2393 = vpack.c.b16 %v2305, %v2303
    %v2394 = vpack.c.b16 %v2308, %v2306
    %v2395 = vpack.c.b16 %v2309, %v2307
    %v2396 = vpack.c.b16 %v2312, %v2310
    %v2397 = vpack.c.b16 %v2313, %v2311
    %v2398 = vpack.c.b16 %v2316, %v2314
    %v2399 = vpack.c.b16 %v2317, %v2315
    %v2400 = vpack.c.b16 %v2320, %v2318
    %v2401 = vpack.c.b16 %v2321, %v2319
    %v2402 = vpack.c.b16 %v2324, %v2322
    %v2403 = vpack.c.b16 %v2325, %v2323
    %v2404 = vpack.c.b16 %v2328, %v2326
    %v2405 = vpack.c.b16 %v2329, %v2327
    %v2406 = vpack.c.b16 %v2332, %v2330
    %v2407 = vpack.c.b16 %v2333, %v2331
    %v2408 = vpack.c.b16 %v2336, %v2334
    %v2409 = vpack.c.b16 %v2337, %v2335
    %v2410 = vpack.c.b16 %v2340, %v2338
    %v2411 = vpack.c.b16 %v2341, %v2339
    %v2412 = vpack.c.b16 %v2344, %v2342
    %v2413 = vpack.c.b16 %v2345, %v2343
    %v2414 = vpack.c.b16 %v2348, %v2346
    %v2415 = vpack.c.b16 %v2349, %v2347
    %v2416 = vpack.c.b16 %v2352, %v2350
    %v2417 = vpack.c.b16 %v2353, %v2351
    %2482 = vmatprep.subr.bf16.mxu0 %v2369
    %2483 = vmatpush1.bf16.msra.mxu0 %v2368
    %2484 = vmatprep.subr.bf16.mxu0 %v2367
    %2485 = vmatpush1.bf16.msra.mxu0 %v2366
    %2486 = vmatprep.subr.bf16.mxu0 %v2365
    %2487 = vmatpush1.bf16.msra.mxu0 %v2364
    %2488 = vmatprep.subr.bf16.mxu0 %v2363
    %2489 = vmatpush1.bf16.msra.mxu0 %v2362
    %2490 = vmatprep.subr.bf16.mxu0 %v2361
    %2491 = vmatpush1.bf16.msra.mxu0 %v2360
    %2492 = vmatprep.subr.bf16.mxu0 %v2359
    %2493 = vmatpush1.bf16.msra.mxu0 %v2358
    %2494 = vmatprep.subr.bf16.mxu0 %v2357
    %2495 = vmatpush1.bf16.msra.mxu0 %v2356
    %2496 = vmatprep.subr.bf16.mxu0 %v2355
    %2497 = vmatpush1.bf16.msra.mxu0 %v2354
    %2498 = vmatprep.subr.bf16.mxu0 %v2385
    %2499 = vmatpush2.bf16.msra.mxu0 %v2384
    %2500 = vmatprep.subr.bf16.mxu0 %v2383
    %2501 = vmatpush2.bf16.msra.mxu0 %v2382
    %2502 = vmatprep.subr.bf16.mxu0 %v2381
    %2503 = vmatpush2.bf16.msra.mxu0 %v2380
    %2504 = vmatprep.subr.bf16.mxu0 %v2379
    %2505 = vmatpush2.bf16.msra.mxu0 %v2378
    %2506 = vmatprep.subr.bf16.mxu0 %v2377
    %2507 = vmatpush2.bf16.msra.mxu0 %v2376
    %2508 = vmatprep.subr.bf16.mxu0 %v2375
    %2509 = vmatpush2.bf16.msra.mxu0 %v2374
    %2510 = vmatprep.subr.bf16.mxu0 %v2373
    %2511 = vmatpush2.bf16.msra.mxu0 %v2372
    %2512 = vmatprep.subr.bf16.mxu0 %v2371
    %2513 = vmatpush2.bf16.msra.mxu0 %v2370
    %2514 = vmatprep.mubr.bf16.mxu0 %v2083
    %2515 = vmatmul.mubr.bf16.gmra.mxu0 %v2082
    %v2516 = vpop.f32.mrf.mxu0
    %v2517 = vadd.f32 %v2155, %v2516
    %v2518 = vpop.f32.mrf.mxu0
    %v2519 = vadd.f32 %v2159, %v2518
    %v2520 = vpop.f32.mrf.mxu0
    %v2521 = vadd.f32 %v2155, %v2520
    %v2522 = vpop.f32.mrf.mxu0
    %v2523 = vadd.f32 %v2159, %v2522
    %2524 = vdwg.mxu0
    %2525 = vmatprep.subr.bf16.mxu0 %v2401
    %2526 = vmatpush1.bf16.msra.mxu0 %v2400
    %2527 = vmatprep.subr.bf16.mxu0 %v2399
    %2528 = vmatpush1.bf16.msra.mxu0 %v2398
    %2529 = vmatprep.subr.bf16.mxu0 %v2397
    %2530 = vmatpush1.bf16.msra.mxu0 %v2396
    %2531 = vmatprep.subr.bf16.mxu0 %v2395
    %2532 = vmatpush1.bf16.msra.mxu0 %v2394
    %2533 = vmatprep.subr.bf16.mxu0 %v2393
    %2534 = vmatpush1.bf16.msra.mxu0 %v2392
    %2535 = vmatprep.subr.bf16.mxu0 %v2391
    %2536 = vmatpush1.bf16.msra.mxu0 %v2390
    %2537 = vmatprep.subr.bf16.mxu0 %v2389
    %2538 = vmatpush1.bf16.msra.mxu0 %v2388
    %2539 = vmatprep.subr.bf16.mxu0 %v2387
    %2540 = vmatpush1.bf16.msra.mxu0 %v2386
    %2541 = vmatprep.subr.bf16.mxu0 %v2417
    %2542 = vmatpush2.bf16.msra.mxu0 %v2416
    %2543 = vmatprep.subr.bf16.mxu0 %v2415
    %2544 = vmatpush2.bf16.msra.mxu0 %v2414
    %2545 = vmatprep.subr.bf16.mxu0 %v2413
    %2546 = vmatpush2.bf16.msra.mxu0 %v2412
    %2547 = vmatprep.subr.bf16.mxu0 %v2411
    %2548 = vmatpush2.bf16.msra.mxu0 %v2410
    %2549 = vmatprep.subr.bf16.mxu0 %v2409
    %2550 = vmatpush2.bf16.msra.mxu0 %v2408
    %2551 = vmatprep.subr.bf16.mxu0 %v2407
    %2552 = vmatpush2.bf16.msra.mxu0 %v2406
    %2553 = vmatprep.subr.bf16.mxu0 %v2405
    %2554 = vmatpush2.bf16.msra.mxu0 %v2404
    %2555 = vmatprep.subr.bf16.mxu0 %v2403
    %2556 = vmatpush2.bf16.msra.mxu0 %v2402
    %2557 = vmatprep.mubr.bf16.mxu0 %v2085
    %2558 = vmatmul.mubr.bf16.gmra.mxu0 %v2084
    %v2559 = vpop.f32.mrf.mxu0
    %v2560 = vadd.f32 %v2517, %v2559
    %v2561 = vpop.f32.mrf.mxu0
    %v2562 = vadd.f32 %v2519, %v2561
    %v2563 = vpop.f32.mrf.mxu0
    %v2564 = vadd.f32 %v2521, %v2563
    %v2565 = vpop.f32.mrf.mxu0
    %v2566 = vadd.f32 %v2523, %v2565
    %2567 = vdwg.mxu0
    %v2568 = vmax.f32 %v2560, 0.0
    %v2569 = vmax.f32 %v2562, 0.0
    %v2570 = vmax.f32 %v2564, 0.0
    %v2571 = vmax.f32 %v2566, 0.0
    %v2572 = vpack.c.bf16 %v2570, %v2568
    %v2573 = vpack.c.bf16 %v2571, %v2569
    %v2574 = vld [vmem:[#allocation11] sm:$0xf]
    %v2575 = vld [vmem:[#allocation11 + $0x4] sm:$0xf]
    %v2576 = vld [vmem:[#allocation11 + $0x8] sm:$0xf]
    %v2577 = vld [vmem:[#allocation11 + $0xc] sm:$0xf]
    %v2578 = vld [vmem:[#allocation11 + $0x10] sm:$0xf]
    %v2579 = vld [vmem:[#allocation11 + $0x14] sm:$0xf]
    %v2580 = vld [vmem:[#allocation11 + $0x18] sm:$0xf]
    %v2581 = vld [vmem:[#allocation11 + $0x1c] sm:$0xf]
    %v2582 = vld [vmem:[#allocation11 + $0x20] sm:$0xf]
    %v2583 = vld [vmem:[#allocation11 + $0x24] sm:$0xf]
    %v2584 = vld [vmem:[#allocation11 + $0x28] sm:$0xf]
    %v2585 = vld [vmem:[#allocation11 + $0x2c] sm:$0xf]
    %v2586 = vld [vmem:[#allocation11 + $0x30] sm:$0xf]
    %v2587 = vld [vmem:[#allocation11 + $0x34] sm:$0xf]
    %v2588 = vld [vmem:[#allocation11 + $0x38] sm:$0xf]
    %v2589 = vld [vmem:[#allocation11 + $0x3c] sm:$0xf]
    %v2590 = vld [vmem:[#allocation11 + $0x40] sm:$0xf]
    %v2591 = vld [vmem:[#allocation11 + $0x44] sm:$0xf]
    %v2592 = vld [vmem:[#allocation11 + $0x48] sm:$0xf]
    %v2593 = vld [vmem:[#allocation11 + $0x4c] sm:$0xf]
    %v2594 = vld [vmem:[#allocation11 + $0x50] sm:$0xf]
    %v2595 = vld [vmem:[#allocation11 + $0x54] sm:$0xf]
    %v2596 = vld [vmem:[#allocation11 + $0x58] sm:$0xf]
    %v2597 = vld [vmem:[#allocation11 + $0x5c] sm:$0xf]
    %v2598 = vld [vmem:[#allocation11 + $0x60] sm:$0xf]
    %v2599 = vld [vmem:[#allocation11 + $0x64] sm:$0xf]
    %v2600 = vld [vmem:[#allocation11 + $0x68] sm:$0xf]
    %v2601 = vld [vmem:[#allocation11 + $0x6c] sm:$0xf]
    %v2602 = vld [vmem:[#allocation11 + $0x70] sm:$0xf]
    %v2603 = vld [vmem:[#allocation11 + $0x74] sm:$0xf]
    %v2604 = vld [vmem:[#allocation11 + $0x78] sm:$0xf]
    %v2605 = vld [vmem:[#allocation11 + $0x7c] sm:$0xf]
    %v2606 = vld [vmem:[%s8] sm:$0x1]
    %v2608 = vlaneseq
    %v2609 = vshrl.u32 %v2608, 7
    %v2610 = vsub.s32 0, %v2609
    %v2611 = vrot.slane %v2606, %v2610
    %v2645 = vunpack.c.l.b16 %v2574
    %v2646 = vunpack.c.l.b16 %v2575
    %v2647 = vunpack.c.l.b16 %v2576
    %v2648 = vunpack.c.l.b16 %v2577
    %v2649 = vunpack.c.l.b16 %v2578
    %v2650 = vunpack.c.l.b16 %v2579
    %v2651 = vunpack.c.l.b16 %v2580
    %v2652 = vunpack.c.l.b16 %v2581
    %v2653 = vunpack.c.l.b16 %v2582
    %v2654 = vunpack.c.l.b16 %v2583
    %v2655 = vunpack.c.l.b16 %v2584
    %v2656 = vunpack.c.l.b16 %v2585
    %v2657 = vunpack.c.l.b16 %v2586
    %v2658 = vunpack.c.l.b16 %v2587
    %v2659 = vunpack.c.l.b16 %v2588
    %v2660 = vunpack.c.l.b16 %v2589
    %v2661 = vunpack.c.l.b16 %v2590
    %v2662 = vunpack.c.l.b16 %v2591
    %v2663 = vunpack.c.l.b16 %v2592
    %v2664 = vunpack.c.l.b16 %v2593
    %v2665 = vunpack.c.l.b16 %v2594
    %v2666 = vunpack.c.l.b16 %v2595
    %v2667 = vunpack.c.l.b16 %v2596
    %v2668 = vunpack.c.l.b16 %v2597
    %v2669 = vunpack.c.l.b16 %v2598
    %v2670 = vunpack.c.l.b16 %v2599
    %v2671 = vunpack.c.l.b16 %v2600
    %v2672 = vunpack.c.l.b16 %v2601
    %v2673 = vunpack.c.l.b16 %v2602
    %v2674 = vunpack.c.l.b16 %v2603
    %v2675 = vunpack.c.l.b16 %v2604
    %v2676 = vunpack.c.l.b16 %v2605
    %v2677 = vpack.c.b16 %v2646, %v2645
    %v2678 = vpack.c.b16 %v2648, %v2647
    %v2679 = vpack.c.b16 %v2650, %v2649
    %v2680 = vpack.c.b16 %v2652, %v2651
    %v2681 = vpack.c.b16 %v2654, %v2653
    %v2682 = vpack.c.b16 %v2656, %v2655
    %v2683 = vpack.c.b16 %v2658, %v2657
    %v2684 = vpack.c.b16 %v2660, %v2659
    %v2685 = vpack.c.b16 %v2662, %v2661
    %v2686 = vpack.c.b16 %v2664, %v2663
    %v2687 = vpack.c.b16 %v2666, %v2665
    %v2688 = vpack.c.b16 %v2668, %v2667
    %v2689 = vpack.c.b16 %v2670, %v2669
    %v2690 = vpack.c.b16 %v2672, %v2671
    %v2691 = vpack.c.b16 %v2674, %v2673
    %v2692 = vpack.c.b16 %v2676, %v2675
    %2709 = vmatprep.subr.bf16.mxu0 0
    %2710 = vmatpush1.bf16.msra.mxu0 %v2684
    %2711 = vmatprep.subr.bf16.mxu0 0
    %2712 = vmatpush1.bf16.msra.mxu0 %v2683
    %2713 = vmatprep.subr.bf16.mxu0 0
    %2714 = vmatpush1.bf16.msra.mxu0 %v2682
    %2715 = vmatprep.subr.bf16.mxu0 0
    %2716 = vmatpush1.bf16.msra.mxu0 %v2681
    %2717 = vmatprep.subr.bf16.mxu0 0
    %2718 = vmatpush1.bf16.msra.mxu0 %v2680
    %2719 = vmatprep.subr.bf16.mxu0 0
    %2720 = vmatpush1.bf16.msra.mxu0 %v2679
    %2721 = vmatprep.subr.bf16.mxu0 0
    %2722 = vmatpush1.bf16.msra.mxu0 %v2678
    %2723 = vmatprep.subr.bf16.mxu0 0
    %2724 = vmatpush1.bf16.msra.mxu0 %v2677
    %2725 = vmatprep.subr.bf16.mxu0 0
    %2726 = vmatpush2.bf16.msra.mxu0 %v2692
    %2727 = vmatprep.subr.bf16.mxu0 0
    %2728 = vmatpush2.bf16.msra.mxu0 %v2691
    %2729 = vmatprep.subr.bf16.mxu0 0
    %2730 = vmatpush2.bf16.msra.mxu0 %v2690
    %2731 = vmatprep.subr.bf16.mxu0 0
    %2732 = vmatpush2.bf16.msra.mxu0 %v2689
    %2733 = vmatprep.subr.bf16.mxu0 0
    %2734 = vmatpush2.bf16.msra.mxu0 %v2688
    %2735 = vmatprep.subr.bf16.mxu0 0
    %2736 = vmatpush2.bf16.msra.mxu0 %v2687
    %2737 = vmatprep.subr.bf16.mxu0 0
    %2738 = vmatpush2.bf16.msra.mxu0 %v2686
    %2739 = vmatprep.subr.bf16.mxu0 0
    %2740 = vmatpush2.bf16.msra.mxu0 %v2685
    %2741 = vmatprep.mubr.bf16.mxu0 %v2573
    %2742 = vmatmul.mubr.bf16.gmra.mxu0 %v2572
    %v2743 = vpop.f32.mrf.mxu0
    %v2744 = vadd.f32 %v2611, %v2743
    %v2745 = vpop.f32.mrf.mxu0
    %v2746 = vpop.f32.mrf.mxu0
    %v2747 = vadd.f32 %v2611, %v2746
    %v2748 = vpop.f32.mrf.mxu0
    %2749 = vdwg.mxu0
    %2750 = vst [vmem:[#allocation13] sm:$0xff] %v2744
    %2751 = vst [vmem:[#allocation13 + $0x8] sm:$0xff] %v2747
    // Predicated region
    $region62: #{tpu_custom_call.1} parent=1 // pred_check
      _
    $region63: #{tpu_custom_call.1} parent=1 // pred_check_branch
      %2753 = sbr.rel (0) target = $region65
    $region64: #{tpu_custom_call.1} parent=1 // pred_region
      %s2755 = ssub.s32 256, 256
      %2756 = vsyncadd [#allocation4], %s2755
      %s2757 = sshll.u32 [#allocation13], 4
      %s2758 = int_to_ptr.vmem [resolvable:$true] %s2757
      %2763 = dma.vmem_to_hbm [thread:$0]  %s2758, 256, %s9, [#allocation4], 128, 128, 8
    $region65: #{tpu_custom_call.1} parent=1 // pred_fallthru
      _
    // Predicated region
    $region66: #{tpu_custom_call.1} parent=1 // pred_check
      _
    $region67: #{tpu_custom_call.1} parent=1 // pred_check_branch
      %2765 = sbr.rel (0) target = $region69
    $region68: #{tpu_custom_call.1} parent=1 // pred_region
      %2766 = dma.done [#allocation4], 256
    $region69: #{tpu_custom_call.1} parent=1 // pred_fallthru
      _
    %2767 = vsyncpa [#allocation3], 1
    %2768 = vsyncpa [#allocation6], 1
    %2769 = vsyncpa [#allocation9], 1
    %2770 = vsyncpa [#allocation12], 1
    %2771 = vsyncpa [#allocation4], 1

</llo_original>
